<compile_context>
chip_gen: v7x
topology: tpu7x:2x2x1
jax: 0.10.0
libtpu: 0.0.40
codegen_flags: <defaults>
</compile_context>

<pallas_src>
import jax
import jax.numpy as jnp
from jax import lax
from jax.experimental import pallas as pl
from jax.experimental.pallas import tpu as pltpu

_LANES = 128


def _round_up(x, m):
    return (x + m - 1) // m * m


def _make_textcnn_kernel(kernel_sizes, num_channels, *, tb, seq_len, group_w,
                         labels_pad, fused_gather, vocab,
                         matmul_dtype=jnp.bfloat16):
    kernel_sizes = tuple(kernel_sizes)
    num_channels = tuple(num_channels)
    sum_c = sum(num_channels)
    max_k = max(kernel_sizes)
    L = seq_len
    n_rows = tb * L

    def _body(emb, wcat_ref, bias_ref, thr_ref, fcw_ref, fcb_ref, out_ref):
        # emb: (tb*L, D) in matmul dtype.
        # One MXU call covering every conv branch and every tap (tap-major,
        # each tap group lane-aligned to a 128-column boundary).
        y = jnp.dot(emb, wcat_ref[...], preferred_element_type=jnp.float32)

        # Valid 1-D conv realized as shift-adds: one sublane roll per tap
        # shift j, shared across all branches -> max(k)-1 rolls total.
        # roll by (n_rows - j) == roll by -j: rolled[t] = tap[t + j].
        acc = y[:, 0:sum_c]
        for j in range(1, max_k):
            tap = y[:, j * group_w: j * group_w + sum_c]
            acc = acc + pltpu.roll(tap, n_rows - j, axis=0)

        # Single merged epilogue over the (tb*L, sum_c) slab.
        acc = jnp.maximum(acc + bias_ref[...], 0.0)             # bias + ReLU
        acc3 = acc.reshape(tb, L, sum_c)
        # One hoisted iota; per-channel threshold (L - k) masks invalid tail
        # positions (incl. roll wrap-around rows).  Post-ReLU values are >= 0,
        # so a 0 mask cannot change the per-example max.
        t_idx = lax.broadcasted_iota(jnp.int32, (1, L, sum_c), 1)
        thr = thr_ref[...].reshape(1, 1, sum_c)
        acc3 = jnp.where(t_idx <= thr, acc3, 0.0)
        pooled = jnp.max(acc3, axis=1)                          # (tb, sum_c)

        # One FC matmul into a lane-dense (128-wide, zero-padded) logit block.
        logits = jnp.dot(pooled, fcw_ref[...],
                         preferred_element_type=jnp.float32) + fcb_ref[...]
        out_ref[...] = logits.astype(out_ref.dtype)

    if fused_gather:
        V = vocab

        def kernel(ids_ref, tbl_ref, wcat_ref, bias_ref, thr_ref, fcw_ref,
                   fcb_ref, out_ref):
            # Fused embedding gather: exact one-hot matmul against the
            # VMEM-resident bf16 table (no (B, L, D) HBM round trip).
            ids = ids_ref[...]                                  # (tb, L) i32
            eq = ids[:, :, None] == lax.broadcasted_iota(
                jnp.int32, (1, 1, V), 2)
            onehot = jnp.where(eq, 1.0, 0.0).astype(matmul_dtype)
            onehot = onehot.reshape(n_rows, V)
            emb = jnp.dot(onehot, tbl_ref[...],
                          preferred_element_type=jnp.float32)
            _body(emb.astype(matmul_dtype), wcat_ref, bias_ref, thr_ref,
                  fcw_ref, fcb_ref, out_ref)
    else:
        def kernel(emb_ref, wcat_ref, bias_ref, thr_ref, fcw_ref, fcb_ref,
                   out_ref):
            _body(emb_ref[...], wcat_ref, bias_ref, thr_ref, fcw_ref,
                  fcb_ref, out_ref)

    return kernel


def _auto_batch_tile(B, L, D, ncat, vocab, fused,
                     *, vmem_budget=16 << 20, max_tile=512):
    """Pick a batch tile from a rough per-step live-VMEM estimate."""
    per_row = L * ncat * 4                       # y = emb @ wcat (f32 slab)
    per_row += 3 * L * _LANES * 4                # acc slab + rolled temps
    per_row += L * D * (4 + 2)                   # gathered emb (f32 + bf16)
    if fused:
        per_row += L * vocab * (4 + 2)           # one-hot build (f32 + bf16)
        per_row += 2 * L * _LANES * 4            # 2x-buffered (tb, L) id block
    else:
        per_row += 2 * L * D * 2                 # 2x-buffered bf16 activations
    tb = min(max_tile, vmem_budget // max(per_row, 1))
    tb = max(8, (tb // 8) * 8)
    # Keep >=2 grid steps so both v7x TensorCores (megacore) get work.
    tb = min(tb, _round_up(max(8, -(-B // 2)), 8))
    return tb


def textcnn_forward(token_ids, emb_table, conv_ws, conv_bs, fc_w, fc_b,
                    kernel_sizes, num_channels, labels_num, *,
                    batch_tile=None, matmul_dtype=jnp.bfloat16,
                    fuse_embedding_gather=None, max_fused_vocab=2048):
    """TextCNN forward pass (eval mode: dropout == identity).

    token_ids : (B, L) int32
    emb_table : (V, D) f32                 -- embedding_train.weight
    conv_ws   : list of (k_i, D, C_i) f32  -- Conv1d weights, tap-major
    conv_bs   : list of (C_i,) f32
    fc_w      : (sum_i C_i, labels) f32    -- fc.weight.T
    fc_b      : (labels,) f32
    """
    kernel_sizes = tuple(int(k) for k in kernel_sizes)
    num_channels = tuple(int(c) for c in num_channels)
    B, L = token_ids.shape
    V, D = emb_table.shape
    sum_c = sum(num_channels)
    max_k = max(kernel_sizes)
    assert L >= max_k, "seq_len must be >= max kernel size (Conv1d would error)"

    if fuse_embedding_gather is None:
        # Fuse the gather when the bf16 table comfortably stays VMEM-resident
        # and the one-hot matmul is cheap.
        fuse_embedding_gather = (V <= max_fused_vocab and V * D * 2 <= (4 << 20))

    # --- Fold every conv branch/tap into one lane-aligned, tap-major slab.
    # Group j holds tap-j columns of all branches (zeros where j >= k_i),
    # padded to a 128-lane boundary so in-kernel slices are lane-aligned and
    # one roll per shift j covers all branches.
    group_w = _round_up(sum_c, _LANES)
    groups = []
    for j in range(max_k):
        taps = []
        for w, k, c in zip(conv_ws, kernel_sizes, num_channels):
            taps.append(w[j].astype(matmul_dtype) if j < k
                        else jnp.zeros((D, c), matmul_dtype))
        g = jnp.concatenate(taps, axis=1)                      # (D, sum_c)
        g = jnp.pad(g, ((0, 0), (0, group_w - sum_c)))
        groups.append(g)
    wcat = jnp.concatenate(groups, axis=1)                     # (D, max_k*gw)
    ncat = _round_up(max_k * group_w, 256)   # full-width MXU N tiles (v6e/v7x)
    wcat = jnp.pad(wcat, ((0, 0), (0, ncat - max_k * group_w)))

    bias_cat = jnp.concatenate([b.reshape(-1) for b in conv_bs]
                               ).reshape(1, sum_c).astype(jnp.float32)
    # Per-channel valid-time threshold (t <= L - k_i) for the merged mask.
    thresh = jnp.concatenate(
        [jnp.full((c,), L - k, jnp.int32)
         for k, c in zip(kernel_sizes, num_channels)]).reshape(1, sum_c)

    # Lane-dense logits: zero-pad the FC out-dim to a multiple of 128.
    labels_pad = _round_up(labels_num, _LANES)
    fcw = jnp.pad(fc_w.astype(jnp.float32),
                  ((0, 0), (0, labels_pad - labels_num)))
    fcb = jnp.pad(fc_b.astype(jnp.float32).reshape(1, labels_num),
                  ((0, 0), (0, labels_pad - labels_num)))

    # --- Batch tiling.
    if batch_tile is None:
        batch_tile = _auto_batch_tile(B, L, D, ncat, V, fuse_embedding_gather)
    tb = max(8, _round_up(int(batch_tile), 8))
    bp = _round_up(B, tb)
    n_tiles = bp // tb

    kernel = _make_textcnn_kernel(
        kernel_sizes, num_channels, tb=tb, seq_len=L, group_w=group_w,
        labels_pad=labels_pad, fused_gather=fuse_embedding_gather, vocab=V,
        matmul_dtype=matmul_dtype)

    weight_specs = [
        pl.BlockSpec((D, ncat), lambda b: (0, 0)),             # conv W slab
        pl.BlockSpec((1, sum_c), lambda b: (0, 0)),            # conv biases
        pl.BlockSpec((1, sum_c), lambda b: (0, 0)),            # mask thresholds
        pl.BlockSpec((sum_c, labels_pad), lambda b: (0, 0)),   # fc weight
        pl.BlockSpec((1, labels_pad), lambda b: (0, 0)),       # fc bias
    ]
    weight_args = (wcat, bias_cat, thresh, fcw, fcb)

    compiler_params = pltpu.CompilerParams(
        dimension_semantics=("parallel",),        # megacore / v7x 2-TC sharding
        vmem_limit_bytes=48 << 20)

    out_shape = jax.ShapeDtypeStruct((bp, labels_pad), jnp.float32)
    out_spec = pl.BlockSpec((tb, labels_pad), lambda b: (b, 0))

    if fuse_embedding_gather:
        ids = token_ids.astype(jnp.int32)
        if bp != B:
            ids = jnp.pad(ids, ((0, bp - B), (0, 0)))
        tbl = emb_table.astype(matmul_dtype)
        out = pl.pallas_call(
            kernel,
            out_shape=out_shape,
            grid=(n_tiles,),
            in_specs=[pl.BlockSpec((tb, L), lambda b: (b, 0)),  # token ids
                      pl.BlockSpec((V, D), lambda b: (0, 0)),   # emb table
                      *weight_specs],
            out_specs=out_spec,
            compiler_params=compiler_params,
        )(ids, tbl, *weight_args)
    else:
        # TODO(synk): replace this XLA gather (+ (B,L,D) HBM round trip) with
        # an in-kernel DMA / dynamic-gather from an HBM-resident table for
        # large vocabularies.
        emb = jnp.take(emb_table.astype(matmul_dtype), token_ids, axis=0)
        if bp != B:
            emb = jnp.pad(emb, ((0, bp - B), (0, 0), (0, 0)))
        emb_flat = emb.reshape(bp * L, D)
        out = pl.pallas_call(
            kernel,
            out_shape=out_shape,
            grid=(n_tiles,),
            in_specs=[pl.BlockSpec((tb * L, D), lambda b: (b, 0)),
                      *weight_specs],
            out_specs=out_spec,
            compiler_params=compiler_params,
        )(emb_flat, *weight_args)

    return out[:B, :labels_num]


def _reference_forward(token_ids, emb_table, conv_ws, conv_bs, fc_w, fc_b,
                       kernel_sizes):
    """Pure-JAX f32 reference mirroring the PyTorch module (eval mode)."""
    emb = jnp.take(emb_table, token_ids, axis=0)                 # (B, L, D)
    feats = []
    for w, b, k in zip(conv_ws, conv_bs, kernel_sizes):
        L = emb.shape[1]
        l_out = L - k + 1
        acc = jnp.zeros((emb.shape[0], l_out, w.shape[2]), jnp.float32)
        for j in range(k):
            acc = acc + jnp.einsum('bld,dc->blc', emb[:, j:j + l_out, :], w[j])
        acc = jnp.maximum(acc + b[None, None, :], 0.0)
        feats.append(jnp.max(acc, axis=1))                       # (B, C)
    feat = jnp.concatenate(feats, axis=1)
    return feat @ fc_w + fc_b[None, :]


if __name__ == "__main__":
    # Small deterministic config (using_pretrained=False, is_batch_normal=False).
    vocab_num = 64
    word_dim = 32           # train_embedding_word_dim
    seq_len = 16
    batch = 16
    num_channels = [8, 8, 8]
    kernel_sizes = [3, 4, 5]
    labels_num = 4

    key = jax.random.PRNGKey(0)
    keys = jax.random.split(key, 4 + 2 * len(kernel_sizes))

    token_ids = jax.random.randint(keys[0], (batch, seq_len), 0, vocab_num,
                                   dtype=jnp.int32)
    emb_table = jax.random.normal(keys[1], (vocab_num, word_dim),
                                  dtype=jnp.float32) * 0.1

    conv_ws, conv_bs = [], []
    for i, (c, k) in enumerate(zip(num_channels, kernel_sizes)):
        conv_ws.append(jax.random.normal(keys[2 + 2 * i], (k, word_dim, c),
                                         dtype=jnp.float32) * 0.1)
        conv_bs.append(jax.random.normal(keys[3 + 2 * i], (c,),
                                         dtype=jnp.float32) * 0.1)

    sum_c = sum(num_channels)
    fc_w = jax.random.normal(keys[-1], (sum_c, labels_num),
                             dtype=jnp.float32) * 0.1
    fc_b = jnp.linspace(-0.1, 0.1, labels_num, dtype=jnp.float32)

    logits = textcnn_forward(token_ids, emb_table, conv_ws, conv_bs, fc_w,
                             fc_b, kernel_sizes, num_channels, labels_num)
    logits = jax.block_until_ready(logits)

    ref = _reference_forward(token_ids, emb_table, conv_ws, conv_bs, fc_w,
                             fc_b, kernel_sizes)
    ref = jax.block_until_ready(ref)

    assert logits.shape == (batch, labels_num)
    # Kernel feeds bf16 into the MXU (f32 accumulation); compare against the
    # f32 reference with a bf16-appropriate tolerance.
    err = float(jnp.max(jnp.abs(logits - ref)))
    assert jnp.allclose(logits, ref, atol=2e-2, rtol=2e-2), err
    print("KERNEL_OK")
</pallas_src>

<mosaic_0001>
module attributes {stable_mosaic.version = 11 : i64} {
  func.func @kernel(%arg0: i32, %arg1: memref<8x16xi32, #tpu.memory_space<vmem>>, %arg2: memref<64x32xbf16, #tpu.memory_space<vmem>>, %arg3: memref<32x768xbf16, #tpu.memory_space<vmem>>, %arg4: memref<1x24xf32, #tpu.memory_space<vmem>>, %arg5: memref<1x24xi32, #tpu.memory_space<vmem>>, %arg6: memref<24x128xf32, #tpu.memory_space<vmem>>, %arg7: memref<1x128xf32, #tpu.memory_space<vmem>>, %arg8: memref<8x128xf32, #tpu.memory_space<vmem>>) attributes {dimension_semantics = [#tpu.dimension_semantics<parallel>], iteration_bounds = array<i64: 2>, scalar_prefetch = 0 : i64, scratch_operands = 0 : i64, tpu.core_type = #tpu.core_type<tc>, window_params = [{transform_indices = @transform_0, window_bounds = array<i64: 8, 16>}, {pipeline_mode = #tpu.pipeline_mode<synchronous>, transform_indices = @transform_1, window_bounds = array<i64: 64, 32>}, {pipeline_mode = #tpu.pipeline_mode<synchronous>, transform_indices = @transform_2, window_bounds = array<i64: 32, 768>}, {pipeline_mode = #tpu.pipeline_mode<synchronous>, transform_indices = @transform_3, window_bounds = array<i64: 1, 24>}, {pipeline_mode = #tpu.pipeline_mode<synchronous>, transform_indices = @transform_4, window_bounds = array<i64: 1, 24>}, {pipeline_mode = #tpu.pipeline_mode<synchronous>, transform_indices = @transform_5, window_bounds = array<i64: 24, 128>}, {pipeline_mode = #tpu.pipeline_mode<synchronous>, transform_indices = @transform_6, window_bounds = array<i64: 1, 128>}, {transform_indices = @transform_7, window_bounds = array<i64: 8, 128>}]} {
    %c0 = arith.constant 0 : index
    %c0_0 = arith.constant 0 : index
    %0 = vector.load %arg1[%c0, %c0_0] : memref<8x16xi32, #tpu.memory_space<vmem>>, vector<8x16xi32>
    %1 = vector.shape_cast %0 : vector<8x16xi32> to vector<8x16x1xi32>
    %2 = tpu.iota {dimensions = array<i32: 2>} : vector<1x1x64xi32>
    %3 = vector.broadcast %1 : vector<8x16x1xi32> to vector<8x16x64xi32>
    %4 = vector.broadcast %2 : vector<1x1x64xi32> to vector<8x16x64xi32>
    %5 = arith.cmpi eq, %3, %4 : vector<8x16x64xi32>
    %cst = arith.constant 1.000000e+00 : f32
    %cst_1 = arith.constant 0.000000e+00 : f32
    %6 = vector.broadcast %cst : f32 to vector<8x16x64xf32>
    %7 = vector.broadcast %cst_1 : f32 to vector<8x16x64xf32>
    %8 = arith.select %5, %6, %7 : vector<8x16x64xi1>, vector<8x16x64xf32>
    %9 = arith.truncf %8 : vector<8x16x64xf32> to vector<8x16x64xbf16>
    %10 = vector.shape_cast %9 : vector<8x16x64xbf16> to vector<128x64xbf16>
    %c0_2 = arith.constant 0 : index
    %c0_3 = arith.constant 0 : index
    %11 = vector.load %arg2[%c0_2, %c0_3] : memref<64x32xbf16, #tpu.memory_space<vmem>>, vector<64x32xbf16>
    %cst_4 = arith.constant dense<0.000000e+00> : vector<128x32xf32>
    %12 = tpu.matmul %10, %11, %cst_4 {dimension_numbers = #tpu.dot_dimension_numbers<[1], [0], [0], [1], [0, 0, 1, 1], [], []>} : vector<128x64xbf16>, vector<64x32xbf16>, vector<128x32xf32> -> vector<128x32xf32>
    %13 = arith.truncf %12 : vector<128x32xf32> to vector<128x32xbf16>
    %c0_5 = arith.constant 0 : index
    %c0_6 = arith.constant 0 : index
    %14 = vector.load %arg3[%c0_5, %c0_6] : memref<32x768xbf16, #tpu.memory_space<vmem>>, vector<32x768xbf16>
    %cst_7 = arith.constant dense<0.000000e+00> : vector<128x768xf32>
    %15 = tpu.matmul %13, %14, %cst_7 {dimension_numbers = #tpu.dot_dimension_numbers<[1], [0], [0], [1], [0, 0, 1, 1], [], []>} : vector<128x32xbf16>, vector<32x768xbf16>, vector<128x768xf32> -> vector<128x768xf32>
    %16 = vector.extract_strided_slice %15 {offsets = [0, 0], sizes = [128, 24], strides = [1, 1]} : vector<128x768xf32> to vector<128x24xf32>
    %17 = vector.extract_strided_slice %15 {offsets = [0, 128], sizes = [128, 24], strides = [1, 1]} : vector<128x768xf32> to vector<128x24xf32>
    %c127_i32 = arith.constant 127 : i32
    %18 = tpu.dynamic_rotate %17 by %c127_i32 dim 0 : vector<128x24xf32>, i32 -> vector<128x24xf32>
    %19 = arith.addf %16, %18 : vector<128x24xf32>
    %20 = vector.extract_strided_slice %15 {offsets = [0, 256], sizes = [128, 24], strides = [1, 1]} : vector<128x768xf32> to vector<128x24xf32>
    %c126_i32 = arith.constant 126 : i32
    %21 = tpu.dynamic_rotate %20 by %c126_i32 dim 0 : vector<128x24xf32>, i32 -> vector<128x24xf32>
    %22 = arith.addf %19, %21 : vector<128x24xf32>
    %23 = vector.extract_strided_slice %15 {offsets = [0, 384], sizes = [128, 24], strides = [1, 1]} : vector<128x768xf32> to vector<128x24xf32>
    %c125_i32 = arith.constant 125 : i32
    %24 = tpu.dynamic_rotate %23 by %c125_i32 dim 0 : vector<128x24xf32>, i32 -> vector<128x24xf32>
    %25 = arith.addf %22, %24 : vector<128x24xf32>
    %26 = vector.extract_strided_slice %15 {offsets = [0, 512], sizes = [128, 24], strides = [1, 1]} : vector<128x768xf32> to vector<128x24xf32>
    %c124_i32 = arith.constant 124 : i32
    %27 = tpu.dynamic_rotate %26 by %c124_i32 dim 0 : vector<128x24xf32>, i32 -> vector<128x24xf32>
    %28 = arith.addf %25, %27 : vector<128x24xf32>
    %c0_8 = arith.constant 0 : index
    %c0_9 = arith.constant 0 : index
    %29 = vector.load %arg4[%c0_8, %c0_9] : memref<1x24xf32, #tpu.memory_space<vmem>>, vector<1x24xf32>
    %30 = vector.broadcast %29 : vector<1x24xf32> to vector<128x24xf32>
    %31 = arith.addf %28, %30 : vector<128x24xf32>
    %cst_10 = arith.constant 0.000000e+00 : f32
    %32 = vector.broadcast %cst_10 : f32 to vector<128x24xf32>
    %33 = arith.maximumf %31, %32 : vector<128x24xf32>
    %34 = vector.shape_cast %33 : vector<128x24xf32> to vector<8x16x24xf32>
    %35 = tpu.iota {dimensions = array<i32: 1>} : vector<1x16x24xi32>
    %c0_11 = arith.constant 0 : index
    %c0_12 = arith.constant 0 : index
    %36 = vector.load %arg5[%c0_11, %c0_12] : memref<1x24xi32, #tpu.memory_space<vmem>>, vector<1x24xi32>
    %37 = vector.shape_cast %36 : vector<1x24xi32> to vector<1x1x24xi32>
    %38 = vector.broadcast %37 : vector<1x1x24xi32> to vector<1x16x24xi32>
    %39 = arith.cmpi sle, %35, %38 : vector<1x16x24xi32>
    %cst_13 = arith.constant 0.000000e+00 : f32
    %40 = vector.shape_cast %39 : vector<1x16x24xi1> to vector<1x16x24xi1>
    %41 = vector.broadcast %40 : vector<1x16x24xi1> to vector<8x16x24xi1>
    %42 = vector.broadcast %cst_13 : f32 to vector<8x16x24xf32>
    %43 = arith.select %41, %34, %42 : vector<8x16x24xi1>, vector<8x16x24xf32>
    %cst_14 = arith.constant dense<0xFF800000> : vector<8x24xf32>
    %44 = vector.multi_reduction <maximumf>, %43, %cst_14 [1] : vector<8x16x24xf32> to vector<8x24xf32>
    %c0_15 = arith.constant 0 : index
    %c0_16 = arith.constant 0 : index
    %45 = vector.load %arg6[%c0_15, %c0_16] : memref<24x128xf32, #tpu.memory_space<vmem>>, vector<24x128xf32>
    %cst_17 = arith.constant dense<0.000000e+00> : vector<8x128xf32>
    %46 = tpu.matmul %44, %45, %cst_17 {dimension_numbers = #tpu.dot_dimension_numbers<[1], [0], [0], [1], [0, 0, 1, 1], [], []>} : vector<8x24xf32>, vector<24x128xf32>, vector<8x128xf32> -> vector<8x128xf32>
    %c0_18 = arith.constant 0 : index
    %c0_19 = arith.constant 0 : index
    %47 = vector.load %arg7[%c0_18, %c0_19] : memref<1x128xf32, #tpu.memory_space<vmem>>, vector<1x128xf32>
    %48 = vector.broadcast %47 : vector<1x128xf32> to vector<8x128xf32>
    %49 = arith.addf %46, %48 : vector<8x128xf32>
    %c0_20 = arith.constant 0 : index
    %c0_21 = arith.constant 0 : index
    %50 = vector.load %arg8[%c0_20, %c0_21] : memref<8x128xf32, #tpu.memory_space<vmem>>, vector<8x128xf32>
    tpu.vector_store %arg8[%c0_20, %c0_21], %49 {strides = array<i32>} : memref<8x128xf32, #tpu.memory_space<vmem>>, vector<8x128xf32>,
    return
  }
  func.func @transform_0(%arg0: i32) -> (i32, i32) {
    %c0_i32 = arith.constant 0 : i32
    %c0_i32_0 = arith.constant 0 : i32
    return %arg0, %c0_i32 : i32, i32
  }
  func.func @transform_1(%arg0: i32) -> (i32, i32) {
    %c0_i32 = arith.constant 0 : i32
    %c0_i32_0 = arith.constant 0 : i32
    %c0_i32_1 = arith.constant 0 : i32
    return %c0_i32, %c0_i32_0 : i32, i32
  }
  func.func @transform_2(%arg0: i32) -> (i32, i32) {
    %c0_i32 = arith.constant 0 : i32
    %c0_i32_0 = arith.constant 0 : i32
    %c0_i32_1 = arith.constant 0 : i32
    return %c0_i32, %c0_i32_0 : i32, i32
  }
  func.func @transform_3(%arg0: i32) -> (i32, i32) {
    %c0_i32 = arith.constant 0 : i32
    %c0_i32_0 = arith.constant 0 : i32
    %c0_i32_1 = arith.constant 0 : i32
    return %c0_i32, %c0_i32_0 : i32, i32
  }
  func.func @transform_4(%arg0: i32) -> (i32, i32) {
    %c0_i32 = arith.constant 0 : i32
    %c0_i32_0 = arith.constant 0 : i32
    %c0_i32_1 = arith.constant 0 : i32
    return %c0_i32, %c0_i32_0 : i32, i32
  }
  func.func @transform_5(%arg0: i32) -> (i32, i32) {
    %c0_i32 = arith.constant 0 : i32
    %c0_i32_0 = arith.constant 0 : i32
    %c0_i32_1 = arith.constant 0 : i32
    return %c0_i32, %c0_i32_0 : i32, i32
  }
  func.func @transform_6(%arg0: i32) -> (i32, i32) {
    %c0_i32 = arith.constant 0 : i32
    %c0_i32_0 = arith.constant 0 : i32
    %c0_i32_1 = arith.constant 0 : i32
    return %c0_i32, %c0_i32_0 : i32, i32
  }
  func.func @transform_7(%arg0: i32) -> (i32, i32) {
    %c0_i32 = arith.constant 0 : i32
    %c0_i32_0 = arith.constant 0 : i32
    return %arg0, %c0_i32 : i32, i32
  }
}

</mosaic_0001>

<llo_original>
// kernel: tpu_custom_call.1
$region0: #{tpu_custom_call.1}
  #allocation0 [shape = 'u32[]', space=smem, size = 0x4, offset = 0x4, fixed_abs, tag = 'smem constant byte address 0x4 - core index']
  #allocation1 [shape = 'u32[144,128]{1,0:T(1,128)}', space=vmem, size = 0x12000, scoped, tag = 'internal scratch']
  %s0 = inlined_call_operand.vmem [shape: s32[16,16], index: 0, kind: input, shape index: {}]
  %s1 = inlined_call_operand.vmem [shape: bf16[64,32], index: 1, kind: input, shape index: {}]
  %s2 = inlined_call_operand.hbm [shape: bf16[32,768], index: 2, kind: input, shape index: {}]
  %s3 = inlined_call_operand.vmem [shape: f32[1,24], index: 3, kind: input, shape index: {}]
  %s4 = inlined_call_operand.vmem [shape: s32[1,24], index: 4, kind: input, shape index: {}]
  %s5 = inlined_call_operand.vmem [shape: f32[24,128], index: 5, kind: input, shape index: {}]
  %s6 = inlined_call_operand.vmem [shape: f32[1,128], index: 6, kind: input, shape index: {}]
  %s7 = inlined_call_operand.hbm [shape: f32[16,128], index: 7, kind: output, shape index: {}]
  %s8 = sld [smem:[#allocation0]]
  $region65: #{tpu_custom_call.1} parent=0
    _
  %s10 = ssub.s32 1, %s8
  %s11 = scalar_select 0, %s10, %s8
  $region1: #{tpu_custom_call.1} parent=0
    #allocation2 [shape = 'u8[49152]{0}', space=vmem, size = 0xc000, scoped, tag = 'input window, operand 2, single buffered']
    #allocation3 [shape = 's32[2]{0}', space=sflag, size = 0x8, scoped, tag = 'scoped memory for tpu_custom_call.1']
    #allocation4 [shape = 's32[2]{0}', space=sflag, size = 0x8, scoped, tag = 'scoped memory for tpu_custom_call.1']
    #allocation5 [shape = 'u8[8192]{0}', space=vmem, size = 0x2000, scoped, tag = 'output window, operand 0']
    %12 = vsyncpa [#allocation3], 0
    %13 = vsyncpa [#allocation4], 0
    %s14 = scalar_lea.sflag [#allocation4], 1
    %15 = vsyncpa %s14, 0
    loop: start=0, step=1, limit=4
    $region2: #{tpu_custom_call.1} parent=1 // loop_pre_header
      _
    $region3: #{tpu_custom_call.1} parent=1 // loop_header
      %s17 = sphi 0, %s21
      %p18 = scmp.ge.s32.totalorder %s17, 4
      %s27 = sphi 0, %s29
      %s30 = sphi 0, %s27
      %s31 = sphi 0, %s30
      %s47 = sphi 0, %s31
      %s51 = sphi 0, %s51
      %s53 = sphi 0, %s51
      %s54 = sphi 0, %s53
      %s68 = sphi 0, %s54
      %s72 = sphi 0, %s72
      %s74 = sphi 0, %s72
      %s75 = sphi 0, %s74
      %s89 = sphi 0, %s75
      %s93 = sphi 0, %s93
      %s95 = sphi 0, %s93
      %s96 = sphi 0, %s95
      %s110 = sphi 0, %s96
      %s114 = sphi 0, %s114
      %s116 = sphi 0, %s114
      %s117 = sphi 0, %s116
      %s131 = sphi 0, %s117
      %s135 = sphi 0, %s135
      %s137 = sphi 0, %s135
      %s138 = sphi 0, %s137
      %s152 = sphi 0, %s138
      %s156 = sphi 0, %s156
      %s158 = sphi 0, %s156
      %s159 = sphi 0, %s158
      %s173 = sphi 0, %s159
      %s179 = sphi 0, %s181
      %s182 = sphi 0, %s179
      %s183 = sphi 0, %s182
      %s199 = sphi 0, %s183
    $region4: #{tpu_custom_call.1} parent=1 // loop_header_branch
      %20 = sbr.rel (%p18) target = $region8
    $region5: #{tpu_custom_call.1} parent=1 // loop_body
      %s22 = ssub.s32 %s17, 1
      %s23 = ssub.s32 %s17, 2
      %s24 = sadd.s32 %s17, 1
      %s25 = ssub.s32 %s17, %s24
      %p26 = scmp.eq.s32.totalorder %s25, 0
      %s28 = sadd.s32 %s27, 1
      %s29 = scalar_select %p26, %s27, %s28
      %p32 = pneg %p26
      %p33 = scmp.eq.s32.totalorder %s17, 1
      %p34 = por %p32, %p33
      %p35 = scmp.ne.s32.totalorder %s27, %s30
      %p36 = scmp.eq.s32.totalorder %s17, 0
      %p37 = por %p35, %p36
      %p38 = scmp.ne.s32.totalorder %s27, %s30
      %p39 = scmp.eq.s32.totalorder %s22, 1
      %p40 = por %p38, %p39
      %p41 = scmp.ne.s32.totalorder %s30, %s31
      %p42 = scmp.eq.s32.totalorder %s22, 0
      %p43 = por %p41, %p42
      %p44 = scmp.ne.s32.totalorder %s30, %s31
      %p45 = scmp.eq.s32.totalorder %s23, 1
      %p46 = por %p44, %p45
      %p48 = scmp.ne.s32.totalorder %s31, %s47
      %p49 = scmp.eq.s32.totalorder %s23, 0
      %p50 = por %p48, %p49
      %s52 = sadd.s32 %s51, 1
      %p55 = scmp.eq.s32.totalorder %s17, 1
      %p56 = scmp.ne.s32.totalorder %s51, %s53
      %p57 = scmp.eq.s32.totalorder %s17, 0
      %p58 = por %p56, %p57
      %p59 = scmp.ne.s32.totalorder %s51, %s53
      %p60 = scmp.eq.s32.totalorder %s22, 1
      %p61 = por %p59, %p60
      %p62 = scmp.ne.s32.totalorder %s53, %s54
      %p63 = scmp.eq.s32.totalorder %s22, 0
      %p64 = por %p62, %p63
      %p65 = scmp.ne.s32.totalorder %s53, %s54
      %p66 = scmp.eq.s32.totalorder %s23, 1
      %p67 = por %p65, %p66
      %p69 = scmp.ne.s32.totalorder %s54, %s68
      %p70 = scmp.eq.s32.totalorder %s23, 0
      %p71 = por %p69, %p70
      %s73 = sadd.s32 %s72, 1
      %p76 = scmp.eq.s32.totalorder %s17, 1
      %p77 = scmp.ne.s32.totalorder %s72, %s74
      %p78 = scmp.eq.s32.totalorder %s17, 0
      %p79 = por %p77, %p78
      %p80 = scmp.ne.s32.totalorder %s72, %s74
      %p81 = scmp.eq.s32.totalorder %s22, 1
      %p82 = por %p80, %p81
      %p83 = scmp.ne.s32.totalorder %s74, %s75
      %p84 = scmp.eq.s32.totalorder %s22, 0
      %p85 = por %p83, %p84
      %p86 = scmp.ne.s32.totalorder %s74, %s75
      %p87 = scmp.eq.s32.totalorder %s23, 1
      %p88 = por %p86, %p87
      %p90 = scmp.ne.s32.totalorder %s75, %s89
      %p91 = scmp.eq.s32.totalorder %s23, 0
      %p92 = por %p90, %p91
      %s94 = sadd.s32 %s93, 1
      %p97 = scmp.eq.s32.totalorder %s17, 1
      %p98 = scmp.ne.s32.totalorder %s93, %s95
      %p99 = scmp.eq.s32.totalorder %s17, 0
      %p100 = por %p98, %p99
      %p101 = scmp.ne.s32.totalorder %s93, %s95
      %p102 = scmp.eq.s32.totalorder %s22, 1
      %p103 = por %p101, %p102
      %p104 = scmp.ne.s32.totalorder %s95, %s96
      %p105 = scmp.eq.s32.totalorder %s22, 0
      %p106 = por %p104, %p105
      %p107 = scmp.ne.s32.totalorder %s95, %s96
      %p108 = scmp.eq.s32.totalorder %s23, 1
      %p109 = por %p107, %p108
      %p111 = scmp.ne.s32.totalorder %s96, %s110
      %p112 = scmp.eq.s32.totalorder %s23, 0
      %p113 = por %p111, %p112
      %s115 = sadd.s32 %s114, 1
      %p118 = scmp.eq.s32.totalorder %s17, 1
      %p119 = scmp.ne.s32.totalorder %s114, %s116
      %p120 = scmp.eq.s32.totalorder %s17, 0
      %p121 = por %p119, %p120
      %p122 = scmp.ne.s32.totalorder %s114, %s116
      %p123 = scmp.eq.s32.totalorder %s22, 1
      %p124 = por %p122, %p123
      %p125 = scmp.ne.s32.totalorder %s116, %s117
      %p126 = scmp.eq.s32.totalorder %s22, 0
      %p127 = por %p125, %p126
      %p128 = scmp.ne.s32.totalorder %s116, %s117
      %p129 = scmp.eq.s32.totalorder %s23, 1
      %p130 = por %p128, %p129
      %p132 = scmp.ne.s32.totalorder %s117, %s131
      %p133 = scmp.eq.s32.totalorder %s23, 0
      %p134 = por %p132, %p133
      %s136 = sadd.s32 %s135, 1
      %p139 = scmp.eq.s32.totalorder %s17, 1
      %p140 = scmp.ne.s32.totalorder %s135, %s137
      %p141 = scmp.eq.s32.totalorder %s17, 0
      %p142 = por %p140, %p141
      %p143 = scmp.ne.s32.totalorder %s135, %s137
      %p144 = scmp.eq.s32.totalorder %s22, 1
      %p145 = por %p143, %p144
      %p146 = scmp.ne.s32.totalorder %s137, %s138
      %p147 = scmp.eq.s32.totalorder %s22, 0
      %p148 = por %p146, %p147
      %p149 = scmp.ne.s32.totalorder %s137, %s138
      %p150 = scmp.eq.s32.totalorder %s23, 1
      %p151 = por %p149, %p150
      %p153 = scmp.ne.s32.totalorder %s138, %s152
      %p154 = scmp.eq.s32.totalorder %s23, 0
      %p155 = por %p153, %p154
      %s157 = sadd.s32 %s156, 1
      %p160 = scmp.eq.s32.totalorder %s17, 1
      %p161 = scmp.ne.s32.totalorder %s156, %s158
      %p162 = scmp.eq.s32.totalorder %s17, 0
      %p163 = por %p161, %p162
      %p164 = scmp.ne.s32.totalorder %s156, %s158
      %p165 = scmp.eq.s32.totalorder %s22, 1
      %p166 = por %p164, %p165
      %p167 = scmp.ne.s32.totalorder %s158, %s159
      %p168 = scmp.eq.s32.totalorder %s22, 0
      %p169 = por %p167, %p168
      %p170 = scmp.ne.s32.totalorder %s158, %s159
      %p171 = scmp.eq.s32.totalorder %s23, 1
      %p172 = por %p170, %p171
      %p174 = scmp.ne.s32.totalorder %s159, %s173
      %p175 = scmp.eq.s32.totalorder %s23, 0
      %p176 = por %p174, %p175
      %s177 = ssub.s32 %s17, %s24
      %p178 = scmp.eq.s32.totalorder %s177, 0
      %s180 = sadd.s32 %s179, 1
      %s181 = scalar_select %p178, %s179, %s180
      %p184 = pneg %p178
      %p185 = scmp.eq.s32.totalorder %s17, 1
      %p186 = por %p184, %p185
      %p187 = scmp.ne.s32.totalorder %s179, %s182
      %p188 = scmp.eq.s32.totalorder %s17, 0
      %p189 = por %p187, %p188
      %p190 = scmp.ne.s32.totalorder %s179, %s182
      %p191 = scmp.eq.s32.totalorder %s22, 1
      %p192 = por %p190, %p191
      %p193 = scmp.ne.s32.totalorder %s182, %s183
      %p194 = scmp.eq.s32.totalorder %s22, 0
      %p195 = por %p193, %p194
      %p196 = scmp.ne.s32.totalorder %s182, %s183
      %p197 = scmp.eq.s32.totalorder %s23, 1
      %p198 = por %p196, %p197
      %p200 = scmp.ne.s32.totalorder %s183, %s199
      %p201 = scmp.eq.s32.totalorder %s23, 0
      %p202 = por %p200, %p201
      %p203 = scmp.le.s32.totalorder 1, %s17
      %p204 = scmp.lt.s32.totalorder %s17, 3
      %p205 = pnand %p203, %p204
      %p206 = pneg %p205
      // Predicated region
      $region9: #{tpu_custom_call.1} parent=5 // pred_check
        _
      $region10: #{tpu_custom_call.1} parent=5 // pred_check_branch
        %208 = sbr.rel (%p205) target = $region12
      $region11: #{tpu_custom_call.1} parent=5 // pred_region
        %s209 = ssub.s32 %s17, 1
        // Predicated region
        $region13: #{tpu_custom_call.1} parent=11 // pred_check
          %p210 = pneg %p64
        $region14: #{tpu_custom_call.1} parent=11 // pred_check_branch
          %212 = sbr.rel (%p210) target = $region16
        $region15: #{tpu_custom_call.1} parent=11 // pred_region
          _
        $region16: #{tpu_custom_call.1} parent=11 // pred_fallthru
          _
        // Predicated region
        $region17: #{tpu_custom_call.1} parent=11 // pred_check
          %p213 = pneg %p85
        $region18: #{tpu_custom_call.1} parent=11 // pred_check_branch
          %215 = sbr.rel (%p213) target = $region20
        $region19: #{tpu_custom_call.1} parent=11 // pred_region
          %s217 = ssub.s32 1536, 1536
          %218 = vsyncadd [#allocation3], %s217
          %s219 = sshll.u32 [#allocation2], 4
          %s220 = int_to_ptr.vmem [resolvable:$true] %s219
          %225 = dma.hbm_to_vmem [thread:$0]  %s2, 1536, %s220, [#allocation3], 384, 384, 24
        $region20: #{tpu_custom_call.1} parent=11 // pred_fallthru
          _
        // Predicated region
        $region21: #{tpu_custom_call.1} parent=11 // pred_check
          %p226 = pneg %p106
        $region22: #{tpu_custom_call.1} parent=11 // pred_check_branch
          %228 = sbr.rel (%p226) target = $region24
        $region23: #{tpu_custom_call.1} parent=11 // pred_region
          _
        $region24: #{tpu_custom_call.1} parent=11 // pred_fallthru
          _
        // Predicated region
        $region25: #{tpu_custom_call.1} parent=11 // pred_check
          %p229 = pneg %p127
        $region26: #{tpu_custom_call.1} parent=11 // pred_check_branch
          %231 = sbr.rel (%p229) target = $region28
        $region27: #{tpu_custom_call.1} parent=11 // pred_region
          _
        $region28: #{tpu_custom_call.1} parent=11 // pred_fallthru
          _
        // Predicated region
        $region29: #{tpu_custom_call.1} parent=11 // pred_check
          %p232 = pneg %p148
        $region30: #{tpu_custom_call.1} parent=11 // pred_check_branch
          %234 = sbr.rel (%p232) target = $region32
        $region31: #{tpu_custom_call.1} parent=11 // pred_region
          _
        $region32: #{tpu_custom_call.1} parent=11 // pred_fallthru
          _
        // Predicated region
        $region33: #{tpu_custom_call.1} parent=11 // pred_check
          %p235 = pneg %p169
        $region34: #{tpu_custom_call.1} parent=11 // pred_check_branch
          %237 = sbr.rel (%p235) target = $region36
        $region35: #{tpu_custom_call.1} parent=11 // pred_region
          _
        $region36: #{tpu_custom_call.1} parent=11 // pred_fallthru
          _
      $region12: #{tpu_custom_call.1} parent=5 // pred_fallthru
        _
      %p238 = scmp.lt.s32.totalorder %s17, 2
      // Predicated region
      $region37: #{tpu_custom_call.1} parent=5 // pred_check
        %p239 = pneg %p238
      $region38: #{tpu_custom_call.1} parent=5 // pred_check_branch
        %241 = sbr.rel (%p239) target = $region40
      $region39: #{tpu_custom_call.1} parent=5 // pred_region
        // Predicated region
        $region41: #{tpu_custom_call.1} parent=39 // pred_check
          %p242 = pneg %p37
        $region42: #{tpu_custom_call.1} parent=39 // pred_check_branch
          %244 = sbr.rel (%p242) target = $region44
        $region43: #{tpu_custom_call.1} parent=39 // pred_region
          %p245 = scmp.lt.s32.totalorder %s17, 1
          %s246 = scalar_select %p245, %s17, 1
          %s247 = smul.addr %s246, 8
          %s248 = scalar_lea.vmem %s0, %s247
        $region44: #{tpu_custom_call.1} parent=39 // pred_fallthru
          _
      $region40: #{tpu_custom_call.1} parent=5 // pred_fallthru
        _
      %p249 = scmp.le.s32.totalorder 1, %s17
      %p250 = scmp.lt.s32.totalorder %s17, 3
      %p251 = pnand %p249, %p250
      %p252 = pneg %p251
      // Predicated region
      $region45: #{tpu_custom_call.1} parent=5 // pred_check
        _
      $region46: #{tpu_custom_call.1} parent=5 // pred_check_branch
        %254 = sbr.rel (%p251) target = $region48
      $region47: #{tpu_custom_call.1} parent=5 // pred_region
        %s255 = ssub.s32 %s17, 1
        // Predicated region
        $region49: #{tpu_custom_call.1} parent=47 // pred_check
          %p256 = pneg %p85
        $region50: #{tpu_custom_call.1} parent=47 // pred_check_branch
          %258 = sbr.rel (%p256) target = $region52
        $region51: #{tpu_custom_call.1} parent=47 // pred_region
          %259 = dma.done [#allocation3], 1536
        $region52: #{tpu_custom_call.1} parent=47 // pred_fallthru
          _
        %p260 = scmp.lt.s32.totalorder %s22, 1
        %s261 = scalar_select %p260, %s22, 1
        %s262 = smul.addr %s261, 8
        %s263 = scalar_lea.vmem %s0, %s262
        %p264 = pneg %p43
        %p265 = pneg %p40
        %p266 = pneg %p64
        %p267 = pneg %p61
        %p268 = pneg %p85
        %p269 = pneg %p82
        %p270 = pneg %p106
        %p271 = pneg %p103
        %p272 = pneg %p127
        %p273 = pneg %p124
        %p274 = pneg %p148
        %p275 = pneg %p145
        %p276 = pneg %p169
        %p277 = pneg %p166
        %p278 = pneg %p195
        %p279 = pneg %p192
        %s280 = sand.u32 %s182, 1
        %s281 = scalar_lea.sflag [#allocation4], %s280
        %s282 = sand.u32 %s182, 1
        %s283 = smul.addr %s282, 8
        %s284 = scalar_lea.vmem [#allocation5], %s283
        %p285 = scmp.lt.s32.totalorder %s22, 1
        %s286 = scalar_select %p285, %s22, 1
        %s287 = smul.addr %s286, 8
        %s288 = scalar_lea.vmem %s0, %s287
        %v290 = vld [vmem:[%s288] sm:$0xff]
        %v291 = vlaneseq
        %v292 = vshrl.u32 %v291, 7
        %v293 = vsub.s32 0, %v292
        %v294 = vrot.slane %v290, %v293
        %296 = vbcast.lane.b32.xlu0 %v294, 256
        %v297 = vpop.permute.xlu0 %296
        %s299 = sor.u32 256, 8
        %300 = vbcast.lane.b32.xlu0 %v294, %s299
        %v301 = vpop.permute.xlu0 %300
        %v302 = vlaneseq
        %v303 = vshrl.u32 %v302, 7
        %v304 = vsub.s32 1, %v303
        %v305 = vrot.slane %v290, %v304
        %307 = vbcast.lane.b32.xlu0 %v305, 256
        %v308 = vpop.permute.xlu0 %307
        %s310 = sor.u32 256, 8
        %311 = vbcast.lane.b32.xlu0 %v305, %s310
        %v312 = vpop.permute.xlu0 %311
        %v313 = vlaneseq
        %v314 = vshrl.u32 %v313, 7
        %v315 = vsub.s32 2, %v314
        %v316 = vrot.slane %v290, %v315
        %318 = vbcast.lane.b32.xlu0 %v316, 256
        %v319 = vpop.permute.xlu0 %318
        %s321 = sor.u32 256, 8
        %322 = vbcast.lane.b32.xlu0 %v316, %s321
        %v323 = vpop.permute.xlu0 %322
        %v324 = vlaneseq
        %v325 = vshrl.u32 %v324, 7
        %v326 = vsub.s32 3, %v325
        %v327 = vrot.slane %v290, %v326
        %329 = vbcast.lane.b32.xlu0 %v327, 256
        %v330 = vpop.permute.xlu0 %329
        %s332 = sor.u32 256, 8
        %333 = vbcast.lane.b32.xlu0 %v327, %s332
        %v334 = vpop.permute.xlu0 %333
        %v335 = vlaneseq
        %v336 = vshrl.u32 %v335, 7
        %v337 = vsub.s32 4, %v336
        %v338 = vrot.slane %v290, %v337
        %340 = vbcast.lane.b32.xlu0 %v338, 256
        %v341 = vpop.permute.xlu0 %340
        %s343 = sor.u32 256, 8
        %344 = vbcast.lane.b32.xlu0 %v338, %s343
        %v345 = vpop.permute.xlu0 %344
        %v346 = vlaneseq
        %v347 = vshrl.u32 %v346, 7
        %v348 = vsub.s32 5, %v347
        %v349 = vrot.slane %v290, %v348
        %351 = vbcast.lane.b32.xlu0 %v349, 256
        %v352 = vpop.permute.xlu0 %351
        %s354 = sor.u32 256, 8
        %355 = vbcast.lane.b32.xlu0 %v349, %s354
        %v356 = vpop.permute.xlu0 %355
        %v357 = vlaneseq
        %v358 = vshrl.u32 %v357, 7
        %v359 = vsub.s32 6, %v358
        %v360 = vrot.slane %v290, %v359
        %362 = vbcast.lane.b32.xlu0 %v360, 256
        %v363 = vpop.permute.xlu0 %362
        %s365 = sor.u32 256, 8
        %366 = vbcast.lane.b32.xlu0 %v360, %s365
        %v367 = vpop.permute.xlu0 %366
        %v368 = vlaneseq
        %v369 = vshrl.u32 %v368, 7
        %v370 = vsub.s32 7, %v369
        %v371 = vrot.slane %v290, %v370
        %373 = vbcast.lane.b32.xlu0 %v371, 256
        %v374 = vpop.permute.xlu0 %373
        %s376 = sor.u32 256, 8
        %377 = vbcast.lane.b32.xlu0 %v371, %s376
        %v378 = vpop.permute.xlu0 %377
        %v379 = vlaneseq
        %v380 = vand.u32 %v379, 127
        %vm381 = vcmp.eq.s32.totalorder %v297, %v380
        %vm382 = vcmp.eq.s32.totalorder %v301, %v380
        %vm383 = vcmp.eq.s32.totalorder %v308, %v380
        %vm384 = vcmp.eq.s32.totalorder %v312, %v380
        %vm385 = vcmp.eq.s32.totalorder %v319, %v380
        %vm386 = vcmp.eq.s32.totalorder %v323, %v380
        %vm387 = vcmp.eq.s32.totalorder %v330, %v380
        %vm388 = vcmp.eq.s32.totalorder %v334, %v380
        %vm389 = vcmp.eq.s32.totalorder %v341, %v380
        %vm390 = vcmp.eq.s32.totalorder %v345, %v380
        %vm391 = vcmp.eq.s32.totalorder %v352, %v380
        %vm392 = vcmp.eq.s32.totalorder %v356, %v380
        %vm393 = vcmp.eq.s32.totalorder %v363, %v380
        %vm394 = vcmp.eq.s32.totalorder %v367, %v380
        %vm395 = vcmp.eq.s32.totalorder %v374, %v380
        %vm396 = vcmp.eq.s32.totalorder %v378, %v380
        %v397 = vsel %vm381, 1.0, 0.0
        %v398 = vsel %vm382, 1.0, 0.0
        %v399 = vsel %vm383, 1.0, 0.0
        %v400 = vsel %vm384, 1.0, 0.0
        %v401 = vsel %vm385, 1.0, 0.0
        %v402 = vsel %vm386, 1.0, 0.0
        %v403 = vsel %vm387, 1.0, 0.0
        %v404 = vsel %vm388, 1.0, 0.0
        %v405 = vsel %vm389, 1.0, 0.0
        %v406 = vsel %vm390, 1.0, 0.0
        %v407 = vsel %vm391, 1.0, 0.0
        %v408 = vsel %vm392, 1.0, 0.0
        %v409 = vsel %vm393, 1.0, 0.0
        %v410 = vsel %vm394, 1.0, 0.0
        %v411 = vsel %vm395, 1.0, 0.0
        %v412 = vsel %vm396, 1.0, 0.0
        %v413 = vpack.c.bf16 %v398, %v397
        %v414 = vpack.c.bf16 %v400, %v399
        %v415 = vpack.c.bf16 %v402, %v401
        %v416 = vpack.c.bf16 %v404, %v403
        %v417 = vpack.c.bf16 %v406, %v405
        %v418 = vpack.c.bf16 %v408, %v407
        %v419 = vpack.c.bf16 %v410, %v409
        %v420 = vpack.c.bf16 %v412, %v411
        %v421 = vld [vmem:[%s1] sm:$0xf]
        %v422 = vld [vmem:[%s1 + $0x4] sm:$0xf]
        %v423 = vld [vmem:[%s1 + $0x8] sm:$0xf]
        %v424 = vld [vmem:[%s1 + $0xc] sm:$0xf]
        %v425 = vld [vmem:[%s1 + $0x10] sm:$0xf]
        %v426 = vld [vmem:[%s1 + $0x14] sm:$0xf]
        %v427 = vld [vmem:[%s1 + $0x18] sm:$0xf]
        %v428 = vld [vmem:[%s1 + $0x1c] sm:$0xf]
        %v437 = vunpack.c.l.b16 %v421
        %v438 = vunpack.c.l.b16 %v422
        %v439 = vunpack.c.l.b16 %v423
        %v440 = vunpack.c.l.b16 %v424
        %v441 = vunpack.c.l.b16 %v425
        %v442 = vunpack.c.l.b16 %v426
        %v443 = vunpack.c.l.b16 %v427
        %v444 = vunpack.c.l.b16 %v428
        %v445 = vpack.c.b16 %v438, %v437
        %v446 = vpack.c.b16 %v440, %v439
        %v447 = vpack.c.b16 %v442, %v441
        %v448 = vpack.c.b16 %v444, %v443
        %vm453 = vcmask 523264
        %v455 = vsel %vm453, %v413, 0
        %v458 = vsel %vm453, %v414, 0
        %v461 = vsel %vm453, %v415, 0
        %v464 = vsel %vm453, %v416, 0
        %v467 = vsel %vm453, %v417, 0
        %v470 = vsel %vm453, %v418, 0
        %v473 = vsel %vm453, %v419, 0
        %v476 = vsel %vm453, %v420, 0
        %478 = vmatprep.subr.bf16.mxu0 0
        %479 = vmatpush1.bf16.msra.mxu0 %v445
        %480 = vmatprep.subr.bf16.mxu0 0
        %481 = vmatpush1.bf16.msra.mxu0 %v446
        %482 = vmatprep.subr.bf16.mxu0 0
        %483 = vmatpush1.bf16.msra.mxu0 %v447
        %484 = vmatprep.subr.bf16.mxu0 0
        %485 = vmatpush1.bf16.msra.mxu0 %v448
        %486 = vmatprep.subr.bf16.mxu0 0
        %487 = vmatpush1.bf16.msra.mxu0 0
        %488 = vmatprep.subr.bf16.mxu0 0
        %489 = vmatpush1.bf16.msra.mxu0 0
        %490 = vmatprep.subr.bf16.mxu0 0
        %491 = vmatpush1.bf16.msra.mxu0 0
        %492 = vmatprep.subr.bf16.mxu0 0
        %493 = vmatpush1.bf16.msra.mxu0 0
        %494 = vmatprep.subr.bf16.mxu0 0
        %495 = vmatpush1.bf16.msra.mxu0 0
        %496 = vmatprep.subr.bf16.mxu0 0
        %497 = vmatpush1.bf16.msra.mxu0 0
        %498 = vmatprep.subr.bf16.mxu0 0
        %499 = vmatpush1.bf16.msra.mxu0 0
        %500 = vmatprep.subr.bf16.mxu0 0
        %501 = vmatpush1.bf16.msra.mxu0 0
        %502 = vmatprep.subr.bf16.mxu0 0
        %503 = vmatpush1.bf16.msra.mxu0 0
        %504 = vmatprep.subr.bf16.mxu0 0
        %505 = vmatpush1.bf16.msra.mxu0 0
        %506 = vmatprep.subr.bf16.mxu0 0
        %507 = vmatpush1.bf16.msra.mxu0 0
        %508 = vmatprep.subr.bf16.mxu0 0
        %509 = vmatpush1.bf16.msra.mxu0 0
        %510 = vmatprep.mubr.bf16.mxu0 0
        %511 = vmatmul.mubr.bf16.gmra.mrb[0].mxu0 %v455
        %v512 = vpop.f32.mrb[0].mxu0
        %v513 = vadd.f32 0.0, %v512
        %v514 = vpop.f32.mrb[0].mxu0
        %v515 = vpop.f32.mrb[0].mxu0
        %v516 = vadd.f32 0.0, %v515
        %v517 = vpop.f32.mrb[0].mxu0
        %518 = vmatprep.mubr.bf16.mxu0 0
        %519 = vmatmul.mubr.bf16.gmra.mrb[0].mxu0 %v458
        %v520 = vpop.f32.mrb[0].mxu0
        %v521 = vadd.f32 0.0, %v520
        %v522 = vpop.f32.mrb[0].mxu0
        %v523 = vpop.f32.mrb[0].mxu0
        %v524 = vadd.f32 0.0, %v523
        %v525 = vpop.f32.mrb[0].mxu0
        %526 = vmatprep.mubr.bf16.mxu0 0
        %527 = vmatmul.mubr.bf16.gmra.mrb[0].mxu0 %v461
        %v528 = vpop.f32.mrb[0].mxu0
        %v529 = vadd.f32 0.0, %v528
        %v530 = vpop.f32.mrb[0].mxu0
        %v531 = vpop.f32.mrb[0].mxu0
        %v532 = vadd.f32 0.0, %v531
        %v533 = vpop.f32.mrb[0].mxu0
        %534 = vmatprep.mubr.bf16.mxu0 0
        %535 = vmatmul.mubr.bf16.gmra.mrb[0].mxu0 %v464
        %v536 = vpop.f32.mrb[0].mxu0
        %v537 = vadd.f32 0.0, %v536
        %v538 = vpop.f32.mrb[0].mxu0
        %v539 = vpop.f32.mrb[0].mxu0
        %v540 = vadd.f32 0.0, %v539
        %v541 = vpop.f32.mrb[0].mxu0
        %542 = vmatprep.mubr.bf16.mxu0 0
        %543 = vmatmul.mubr.bf16.gmra.mrb[0].mxu0 %v467
        %v544 = vpop.f32.mrb[0].mxu0
        %v545 = vadd.f32 0.0, %v544
        %v546 = vpop.f32.mrb[0].mxu0
        %v547 = vpop.f32.mrb[0].mxu0
        %v548 = vadd.f32 0.0, %v547
        %v549 = vpop.f32.mrb[0].mxu0
        %550 = vmatprep.mubr.bf16.mxu0 0
        %551 = vmatmul.mubr.bf16.gmra.mrb[0].mxu0 %v470
        %v552 = vpop.f32.mrb[0].mxu0
        %v553 = vadd.f32 0.0, %v552
        %v554 = vpop.f32.mrb[0].mxu0
        %v555 = vpop.f32.mrb[0].mxu0
        %v556 = vadd.f32 0.0, %v555
        %v557 = vpop.f32.mrb[0].mxu0
        %558 = vmatprep.mubr.bf16.mxu0 0
        %559 = vmatmul.mubr.bf16.gmra.mrb[0].mxu0 %v473
        %v560 = vpop.f32.mrb[0].mxu0
        %v561 = vadd.f32 0.0, %v560
        %v562 = vpop.f32.mrb[0].mxu0
        %v563 = vpop.f32.mrb[0].mxu0
        %v564 = vadd.f32 0.0, %v563
        %v565 = vpop.f32.mrb[0].mxu0
        %566 = vmatprep.mubr.bf16.mxu0 0
        %567 = vmatmul.mubr.bf16.gmra.mrb[0].mxu0 %v476
        %v568 = vpop.f32.mrb[0].mxu0
        %v569 = vadd.f32 0.0, %v568
        %v570 = vpop.f32.mrb[0].mxu0
        %v571 = vpop.f32.mrb[0].mxu0
        %v572 = vadd.f32 0.0, %v571
        %v573 = vpop.f32.mrb[0].mxu0
        %574 = vdwg.mxu0
        %v575 = vpack.c.bf16 %v516, %v513
        %v576 = vpack.c.bf16 %v524, %v521
        %v577 = vpack.c.bf16 %v532, %v529
        %v578 = vpack.c.bf16 %v540, %v537
        %v579 = vpack.c.bf16 %v548, %v545
        %v580 = vpack.c.bf16 %v556, %v553
        %v581 = vpack.c.bf16 %v564, %v561
        %v582 = vpack.c.bf16 %v572, %v569
        %v583 = vld [vmem:[#allocation2] sm:$0xff]
        %v584 = vld [vmem:[#allocation2 + $0x8] sm:$0xff]
        %v585 = vld [vmem:[#allocation2 + $0x10] sm:$0xff]
        %v586 = vld [vmem:[#allocation2 + $0x18] sm:$0xff]
        %v587 = vld [vmem:[#allocation2 + $0x20] sm:$0xff]
        %v588 = vld [vmem:[#allocation2 + $0x28] sm:$0xff]
        %v589 = vld [vmem:[#allocation2 + $0x30] sm:$0xff]
        %v590 = vld [vmem:[#allocation2 + $0x38] sm:$0xff]
        %v591 = vld [vmem:[#allocation2 + $0x40] sm:$0xff]
        %v592 = vld [vmem:[#allocation2 + $0x48] sm:$0xff]
        %v593 = vld [vmem:[#allocation2 + $0x50] sm:$0xff]
        %v594 = vld [vmem:[#allocation2 + $0x58] sm:$0xff]
        %v607 = vunpack.c.l.b16 %v583
        %v608 = vunpack.c.h.b16 %v583
        %v609 = vunpack.c.l.b16 %v584
        %v610 = vunpack.c.h.b16 %v584
        %v611 = vunpack.c.l.b16 %v585
        %v612 = vunpack.c.h.b16 %v585
        %v613 = vunpack.c.l.b16 %v586
        %v614 = vunpack.c.h.b16 %v586
        %v615 = vunpack.c.l.b16 %v587
        %v616 = vunpack.c.h.b16 %v587
        %v617 = vunpack.c.l.b16 %v588
        %v618 = vunpack.c.h.b16 %v588
        %v619 = vunpack.c.l.b16 %v589
        %v620 = vunpack.c.h.b16 %v589
        %v621 = vunpack.c.l.b16 %v590
        %v622 = vunpack.c.h.b16 %v590
        %v623 = vunpack.c.l.b16 %v591
        %v624 = vunpack.c.h.b16 %v591
        %v625 = vunpack.c.l.b16 %v592
        %v626 = vunpack.c.h.b16 %v592
        %v627 = vunpack.c.l.b16 %v593
        %v628 = vunpack.c.h.b16 %v593
        %v629 = vunpack.c.l.b16 %v594
        %v630 = vunpack.c.h.b16 %v594
        %v631 = vpack.c.b16 %v613, %v607
        %v632 = vpack.c.b16 %v614, %v608
        %v633 = vpack.c.b16 %v615, %v609
        %v634 = vpack.c.b16 %v616, %v610
        %v635 = vpack.c.b16 %v617, %v611
        %v636 = vpack.c.b16 %v618, %v612
        %v637 = vpack.c.b16 %v625, %v619
        %v638 = vpack.c.b16 %v626, %v620
        %v639 = vpack.c.b16 %v627, %v621
        %v640 = vpack.c.b16 %v628, %v622
        %v641 = vpack.c.b16 %v629, %v623
        %v642 = vpack.c.b16 %v630, %v624
        %vm655 = vcmask 261120
        %v657 = vsel %vm655, %v575, 0
        %v660 = vsel %vm655, %v576, 0
        %v663 = vsel %vm655, %v577, 0
        %v666 = vsel %vm655, %v578, 0
        %v669 = vsel %vm655, %v579, 0
        %v672 = vsel %vm655, %v580, 0
        %v675 = vsel %vm655, %v581, 0
        %v678 = vsel %vm655, %v582, 0
        %680 = vmatprep.subr.bf16.mxu0 %v632
        %681 = vmatpush1.bf16.msra.mxu0 %v631
        %682 = vmatprep.subr.bf16.mxu0 %v638
        %683 = vmatpush1.bf16.msra.mxu0 %v637
        %684 = vmatprep.subr.bf16.mxu0 0
        %685 = vmatpush1.bf16.msra.mxu0 0
        %686 = vmatprep.subr.bf16.mxu0 0
        %687 = vmatpush1.bf16.msra.mxu0 0
        %688 = vmatprep.subr.bf16.mxu0 0
        %689 = vmatpush1.bf16.msra.mxu0 0
        %690 = vmatprep.subr.bf16.mxu0 0
        %691 = vmatpush1.bf16.msra.mxu0 0
        %692 = vmatprep.subr.bf16.mxu0 0
        %693 = vmatpush1.bf16.msra.mxu0 0
        %694 = vmatprep.subr.bf16.mxu0 0
        %695 = vmatpush1.bf16.msra.mxu0 0
        %696 = vmatprep.subr.bf16.mxu0 0
        %697 = vmatpush1.bf16.msra.mxu0 0
        %698 = vmatprep.subr.bf16.mxu0 0
        %699 = vmatpush1.bf16.msra.mxu0 0
        %700 = vmatprep.subr.bf16.mxu0 0
        %701 = vmatpush1.bf16.msra.mxu0 0
        %702 = vmatprep.subr.bf16.mxu0 0
        %703 = vmatpush1.bf16.msra.mxu0 0
        %704 = vmatprep.subr.bf16.mxu0 0
        %705 = vmatpush1.bf16.msra.mxu0 0
        %706 = vmatprep.subr.bf16.mxu0 0
        %707 = vmatpush1.bf16.msra.mxu0 0
        %708 = vmatprep.subr.bf16.mxu0 0
        %709 = vmatpush1.bf16.msra.mxu0 0
        %710 = vmatprep.subr.bf16.mxu0 0
        %711 = vmatpush1.bf16.msra.mxu0 0
        %712 = vmatprep.mubr.bf16.mxu0 0
        %713 = vmatmul.mubr.bf16.gmra.mrb[0].mxu0 %v657
        %v714 = vpop.f32.mrb[0].mxu0
        %v715 = vadd.f32 0.0, %v714
        %v716 = vpop.f32.mrb[0].mxu0
        %v717 = vadd.f32 0.0, %v716
        %v718 = vpop.f32.mrb[0].mxu0
        %v719 = vadd.f32 0.0, %v718
        %v720 = vpop.f32.mrb[0].mxu0
        %v721 = vadd.f32 0.0, %v720
        %722 = vmatprep.mubr.bf16.mxu0 0
        %723 = vmatmul.mubr.bf16.gmra.mrb[0].mxu0 %v660
        %v724 = vpop.f32.mrb[0].mxu0
        %v725 = vadd.f32 0.0, %v724
        %v726 = vpop.f32.mrb[0].mxu0
        %v727 = vadd.f32 0.0, %v726
        %v728 = vpop.f32.mrb[0].mxu0
        %v729 = vadd.f32 0.0, %v728
        %v730 = vpop.f32.mrb[0].mxu0
        %v731 = vadd.f32 0.0, %v730
        %732 = vmatprep.mubr.bf16.mxu0 0
        %733 = vmatmul.mubr.bf16.gmra.mrb[0].mxu0 %v663
        %v734 = vpop.f32.mrb[0].mxu0
        %v735 = vadd.f32 0.0, %v734
        %v736 = vpop.f32.mrb[0].mxu0
        %v737 = vadd.f32 0.0, %v736
        %v738 = vpop.f32.mrb[0].mxu0
        %v739 = vadd.f32 0.0, %v738
        %v740 = vpop.f32.mrb[0].mxu0
        %v741 = vadd.f32 0.0, %v740
        %742 = vmatprep.mubr.bf16.mxu0 0
        %743 = vmatmul.mubr.bf16.gmra.mrb[0].mxu0 %v666
        %v744 = vpop.f32.mrb[0].mxu0
        %v745 = vadd.f32 0.0, %v744
        %v746 = vpop.f32.mrb[0].mxu0
        %v747 = vadd.f32 0.0, %v746
        %v748 = vpop.f32.mrb[0].mxu0
        %v749 = vadd.f32 0.0, %v748
        %v750 = vpop.f32.mrb[0].mxu0
        %v751 = vadd.f32 0.0, %v750
        %752 = vmatprep.mubr.bf16.mxu0 0
        %753 = vmatmul.mubr.bf16.gmra.mrb[0].mxu0 %v669
        %v754 = vpop.f32.mrb[0].mxu0
        %v755 = vadd.f32 0.0, %v754
        %v756 = vpop.f32.mrb[0].mxu0
        %v757 = vadd.f32 0.0, %v756
        %v758 = vpop.f32.mrb[0].mxu0
        %v759 = vadd.f32 0.0, %v758
        %v760 = vpop.f32.mrb[0].mxu0
        %v761 = vadd.f32 0.0, %v760
        %762 = vmatprep.mubr.bf16.mxu0 0
        %763 = vmatmul.mubr.bf16.gmra.mrb[0].mxu0 %v672
        %v764 = vpop.f32.mrb[0].mxu0
        %v765 = vadd.f32 0.0, %v764
        %v766 = vpop.f32.mrb[0].mxu0
        %v767 = vadd.f32 0.0, %v766
        %v768 = vpop.f32.mrb[0].mxu0
        %v769 = vadd.f32 0.0, %v768
        %v770 = vpop.f32.mrb[0].mxu0
        %v771 = vadd.f32 0.0, %v770
        %772 = vmatprep.mubr.bf16.mxu0 0
        %773 = vmatmul.mubr.bf16.gmra.mrb[0].mxu0 %v675
        %v774 = vpop.f32.mrb[0].mxu0
        %v775 = vadd.f32 0.0, %v774
        %v776 = vpop.f32.mrb[0].mxu0
        %v777 = vadd.f32 0.0, %v776
        %v778 = vpop.f32.mrb[0].mxu0
        %v779 = vadd.f32 0.0, %v778
        %v780 = vpop.f32.mrb[0].mxu0
        %v781 = vadd.f32 0.0, %v780
        %782 = vmatprep.mubr.bf16.mxu0 0
        %783 = vmatmul.mubr.bf16.gmra.mrb[0].mxu0 %v678
        %v784 = vpop.f32.mrb[0].mxu0
        %v785 = vadd.f32 0.0, %v784
        %v786 = vpop.f32.mrb[0].mxu0
        %v787 = vadd.f32 0.0, %v786
        %v788 = vpop.f32.mrb[0].mxu0
        %v789 = vadd.f32 0.0, %v788
        %v790 = vpop.f32.mrb[0].mxu0
        %v791 = vadd.f32 0.0, %v790
        %792 = vdwg.mxu0
        %793 = vmatprep.subr.bf16.mxu0 %v634
        %794 = vmatpush1.bf16.msra.mxu0 %v633
        %795 = vmatprep.subr.bf16.mxu0 %v640
        %796 = vmatpush1.bf16.msra.mxu0 %v639
        %797 = vmatprep.subr.bf16.mxu0 0
        %798 = vmatpush1.bf16.msra.mxu0 0
        %799 = vmatprep.subr.bf16.mxu0 0
        %800 = vmatpush1.bf16.msra.mxu0 0
        %801 = vmatprep.subr.bf16.mxu0 0
        %802 = vmatpush1.bf16.msra.mxu0 0
        %803 = vmatprep.subr.bf16.mxu0 0
        %804 = vmatpush1.bf16.msra.mxu0 0
        %805 = vmatprep.subr.bf16.mxu0 0
        %806 = vmatpush1.bf16.msra.mxu0 0
        %807 = vmatprep.subr.bf16.mxu0 0
        %808 = vmatpush1.bf16.msra.mxu0 0
        %809 = vmatprep.subr.bf16.mxu0 0
        %810 = vmatpush1.bf16.msra.mxu0 0
        %811 = vmatprep.subr.bf16.mxu0 0
        %812 = vmatpush1.bf16.msra.mxu0 0
        %813 = vmatprep.subr.bf16.mxu0 0
        %814 = vmatpush1.bf16.msra.mxu0 0
        %815 = vmatprep.subr.bf16.mxu0 0
        %816 = vmatpush1.bf16.msra.mxu0 0
        %817 = vmatprep.subr.bf16.mxu0 0
        %818 = vmatpush1.bf16.msra.mxu0 0
        %819 = vmatprep.subr.bf16.mxu0 0
        %820 = vmatpush1.bf16.msra.mxu0 0
        %821 = vmatprep.subr.bf16.mxu0 0
        %822 = vmatpush1.bf16.msra.mxu0 0
        %823 = vmatprep.subr.bf16.mxu0 0
        %824 = vmatpush1.bf16.msra.mxu0 0
        %825 = vmatprep.mubr.bf16.mxu0 0
        %826 = vmatmul.mubr.bf16.gmra.mrb[0].mxu0 %v657
        %v827 = vpop.f32.mrb[0].mxu0
        %v828 = vadd.f32 0.0, %v827
        %v829 = vpop.f32.mrb[0].mxu0
        %v830 = vadd.f32 0.0, %v829
        %v831 = vpop.f32.mrb[0].mxu0
        %v832 = vadd.f32 0.0, %v831
        %v833 = vpop.f32.mrb[0].mxu0
        %v834 = vadd.f32 0.0, %v833
        %835 = vmatprep.mubr.bf16.mxu0 0
        %836 = vmatmul.mubr.bf16.gmra.mrb[0].mxu0 %v660
        %v837 = vpop.f32.mrb[0].mxu0
        %v838 = vadd.f32 0.0, %v837
        %v839 = vpop.f32.mrb[0].mxu0
        %v840 = vadd.f32 0.0, %v839
        %v841 = vpop.f32.mrb[0].mxu0
        %v842 = vadd.f32 0.0, %v841
        %v843 = vpop.f32.mrb[0].mxu0
        %v844 = vadd.f32 0.0, %v843
        %845 = vmatprep.mubr.bf16.mxu0 0
        %846 = vmatmul.mubr.bf16.gmra.mrb[0].mxu0 %v663
        %v847 = vpop.f32.mrb[0].mxu0
        %v848 = vadd.f32 0.0, %v847
        %v849 = vpop.f32.mrb[0].mxu0
        %v850 = vadd.f32 0.0, %v849
        %v851 = vpop.f32.mrb[0].mxu0
        %v852 = vadd.f32 0.0, %v851
        %v853 = vpop.f32.mrb[0].mxu0
        %v854 = vadd.f32 0.0, %v853
        %855 = vmatprep.mubr.bf16.mxu0 0
        %856 = vmatmul.mubr.bf16.gmra.mrb[0].mxu0 %v666
        %v857 = vpop.f32.mrb[0].mxu0
        %v858 = vadd.f32 0.0, %v857
        %v859 = vpop.f32.mrb[0].mxu0
        %v860 = vadd.f32 0.0, %v859
        %v861 = vpop.f32.mrb[0].mxu0
        %v862 = vadd.f32 0.0, %v861
        %v863 = vpop.f32.mrb[0].mxu0
        %v864 = vadd.f32 0.0, %v863
        %865 = vmatprep.mubr.bf16.mxu0 0
        %866 = vmatmul.mubr.bf16.gmra.mrb[0].mxu0 %v669
        %v867 = vpop.f32.mrb[0].mxu0
        %v868 = vadd.f32 0.0, %v867
        %v869 = vpop.f32.mrb[0].mxu0
        %v870 = vadd.f32 0.0, %v869
        %v871 = vpop.f32.mrb[0].mxu0
        %v872 = vadd.f32 0.0, %v871
        %v873 = vpop.f32.mrb[0].mxu0
        %v874 = vadd.f32 0.0, %v873
        %875 = vmatprep.mubr.bf16.mxu0 0
        %876 = vmatmul.mubr.bf16.gmra.mrb[0].mxu0 %v672
        %v877 = vpop.f32.mrb[0].mxu0
        %v878 = vadd.f32 0.0, %v877
        %v879 = vpop.f32.mrb[0].mxu0
        %v880 = vadd.f32 0.0, %v879
        %v881 = vpop.f32.mrb[0].mxu0
        %v882 = vadd.f32 0.0, %v881
        %v883 = vpop.f32.mrb[0].mxu0
        %v884 = vadd.f32 0.0, %v883
        %885 = vmatprep.mubr.bf16.mxu0 0
        %886 = vmatmul.mubr.bf16.gmra.mrb[0].mxu0 %v675
        %v887 = vpop.f32.mrb[0].mxu0
        %v888 = vadd.f32 0.0, %v887
        %v889 = vpop.f32.mrb[0].mxu0
        %v890 = vadd.f32 0.0, %v889
        %v891 = vpop.f32.mrb[0].mxu0
        %v892 = vadd.f32 0.0, %v891
        %v893 = vpop.f32.mrb[0].mxu0
        %v894 = vadd.f32 0.0, %v893
        %895 = vmatprep.mubr.bf16.mxu0 0
        %896 = vmatmul.mubr.bf16.gmra.mrb[0].mxu0 %v678
        %v897 = vpop.f32.mrb[0].mxu0
        %v898 = vadd.f32 0.0, %v897
        %v899 = vpop.f32.mrb[0].mxu0
        %v900 = vadd.f32 0.0, %v899
        %v901 = vpop.f32.mrb[0].mxu0
        %v902 = vadd.f32 0.0, %v901
        %v903 = vpop.f32.mrb[0].mxu0
        %v904 = vadd.f32 0.0, %v903
        %905 = vdwg.mxu0
        %906 = vmatprep.subr.bf16.mxu0 %v636
        %907 = vmatpush1.bf16.msra.mxu0 %v635
        %908 = vmatprep.subr.bf16.mxu0 %v642
        %909 = vmatpush1.bf16.msra.mxu0 %v641
        %910 = vmatprep.subr.bf16.mxu0 0
        %911 = vmatpush1.bf16.msra.mxu0 0
        %912 = vmatprep.subr.bf16.mxu0 0
        %913 = vmatpush1.bf16.msra.mxu0 0
        %914 = vmatprep.subr.bf16.mxu0 0
        %915 = vmatpush1.bf16.msra.mxu0 0
        %916 = vmatprep.subr.bf16.mxu0 0
        %917 = vmatpush1.bf16.msra.mxu0 0
        %918 = vmatprep.subr.bf16.mxu0 0
        %919 = vmatpush1.bf16.msra.mxu0 0
        %920 = vmatprep.subr.bf16.mxu0 0
        %921 = vmatpush1.bf16.msra.mxu0 0
        %922 = vmatprep.subr.bf16.mxu0 0
        %923 = vmatpush1.bf16.msra.mxu0 0
        %924 = vmatprep.subr.bf16.mxu0 0
        %925 = vmatpush1.bf16.msra.mxu0 0
        %926 = vmatprep.subr.bf16.mxu0 0
        %927 = vmatpush1.bf16.msra.mxu0 0
        %928 = vmatprep.subr.bf16.mxu0 0
        %929 = vmatpush1.bf16.msra.mxu0 0
        %930 = vmatprep.subr.bf16.mxu0 0
        %931 = vmatpush1.bf16.msra.mxu0 0
        %932 = vmatprep.subr.bf16.mxu0 0
        %933 = vmatpush1.bf16.msra.mxu0 0
        %934 = vmatprep.subr.bf16.mxu0 0
        %935 = vmatpush1.bf16.msra.mxu0 0
        %936 = vmatprep.subr.bf16.mxu0 0
        %937 = vmatpush1.bf16.msra.mxu0 0
        %938 = vmatprep.mubr.bf16.mxu0 0
        %939 = vmatmul.mubr.bf16.gmra.mrb[0].mxu0 %v657
        %v940 = vpop.f32.mrb[0].mxu0
        %v941 = vadd.f32 0.0, %v940
        %v942 = vpop.f32.mrb[0].mxu0
        %v943 = vpop.f32.mrb[0].mxu0
        %v944 = vadd.f32 0.0, %v943
        %v945 = vpop.f32.mrb[0].mxu0
        %946 = vmatprep.mubr.bf16.mxu0 0
        %947 = vmatmul.mubr.bf16.gmra.mrb[0].mxu0 %v660
        %v948 = vpop.f32.mrb[0].mxu0
        %v949 = vadd.f32 0.0, %v948
        %v950 = vpop.f32.mrb[0].mxu0
        %v951 = vpop.f32.mrb[0].mxu0
        %v952 = vadd.f32 0.0, %v951
        %v953 = vpop.f32.mrb[0].mxu0
        %954 = vmatprep.mubr.bf16.mxu0 0
        %955 = vmatmul.mubr.bf16.gmra.mrb[0].mxu0 %v663
        %v956 = vpop.f32.mrb[0].mxu0
        %v957 = vadd.f32 0.0, %v956
        %v958 = vpop.f32.mrb[0].mxu0
        %v959 = vpop.f32.mrb[0].mxu0
        %v960 = vadd.f32 0.0, %v959
        %v961 = vpop.f32.mrb[0].mxu0
        %962 = vmatprep.mubr.bf16.mxu0 0
        %963 = vmatmul.mubr.bf16.gmra.mrb[0].mxu0 %v666
        %v964 = vpop.f32.mrb[0].mxu0
        %v965 = vadd.f32 0.0, %v964
        %v966 = vpop.f32.mrb[0].mxu0
        %v967 = vpop.f32.mrb[0].mxu0
        %v968 = vadd.f32 0.0, %v967
        %v969 = vpop.f32.mrb[0].mxu0
        %970 = vmatprep.mubr.bf16.mxu0 0
        %971 = vmatmul.mubr.bf16.gmra.mrb[0].mxu0 %v669
        %v972 = vpop.f32.mrb[0].mxu0
        %v973 = vadd.f32 0.0, %v972
        %v974 = vpop.f32.mrb[0].mxu0
        %v975 = vpop.f32.mrb[0].mxu0
        %v976 = vadd.f32 0.0, %v975
        %v977 = vpop.f32.mrb[0].mxu0
        %978 = vmatprep.mubr.bf16.mxu0 0
        %979 = vmatmul.mubr.bf16.gmra.mrb[0].mxu0 %v672
        %v980 = vpop.f32.mrb[0].mxu0
        %v981 = vadd.f32 0.0, %v980
        %v982 = vpop.f32.mrb[0].mxu0
        %v983 = vpop.f32.mrb[0].mxu0
        %v984 = vadd.f32 0.0, %v983
        %v985 = vpop.f32.mrb[0].mxu0
        %986 = vmatprep.mubr.bf16.mxu0 0
        %987 = vmatmul.mubr.bf16.gmra.mrb[0].mxu0 %v675
        %v988 = vpop.f32.mrb[0].mxu0
        %v989 = vadd.f32 0.0, %v988
        %v990 = vpop.f32.mrb[0].mxu0
        %v991 = vpop.f32.mrb[0].mxu0
        %v992 = vadd.f32 0.0, %v991
        %v993 = vpop.f32.mrb[0].mxu0
        %994 = vmatprep.mubr.bf16.mxu0 0
        %995 = vmatmul.mubr.bf16.gmra.mrb[0].mxu0 %v678
        %v996 = vpop.f32.mrb[0].mxu0
        %v997 = vadd.f32 0.0, %v996
        %v998 = vpop.f32.mrb[0].mxu0
        %v999 = vpop.f32.mrb[0].mxu0
        %v1000 = vadd.f32 0.0, %v999
        %v1001 = vpop.f32.mrb[0].mxu0
        %1002 = vdwg.mxu0
        %v1003 = vrot.slane %v717, 1
        %v1004 = vrot.slane %v721, 1
        %v1005 = vrot.slane %v727, 1
        %v1006 = vrot.slane %v731, 1
        %v1007 = vrot.slane %v737, 1
        %v1008 = vrot.slane %v741, 1
        %v1009 = vrot.slane %v747, 1
        %v1010 = vrot.slane %v751, 1
        %v1011 = vrot.slane %v757, 1
        %v1012 = vrot.slane %v761, 1
        %v1013 = vrot.slane %v767, 1
        %v1014 = vrot.slane %v771, 1
        %v1015 = vrot.slane %v777, 1
        %v1016 = vrot.slane %v781, 1
        %v1017 = vrot.slane %v787, 1
        %v1018 = vrot.slane %v791, 1
        %v1019 = vlaneseq
        %v1020 = vshrl.u32 %v1019, 7
        %vm1021 = vcmp.lt.s32.totalorder %v1020, 7
        %v1022 = vsel %vm1021, %v1017, %v1018
        %v1023 = vsel %vm1021, %v1016, %v1017
        %v1024 = vsel %vm1021, %v1015, %v1016
        %v1025 = vsel %vm1021, %v1014, %v1015
        %v1026 = vsel %vm1021, %v1013, %v1014
        %v1027 = vsel %vm1021, %v1012, %v1013
        %v1028 = vsel %vm1021, %v1011, %v1012
        %v1029 = vsel %vm1021, %v1010, %v1011
        %v1030 = vsel %vm1021, %v1009, %v1010
        %v1031 = vsel %vm1021, %v1008, %v1009
        %v1032 = vsel %vm1021, %v1007, %v1008
        %v1033 = vsel %vm1021, %v1006, %v1007
        %v1034 = vsel %vm1021, %v1005, %v1006
        %v1035 = vsel %vm1021, %v1004, %v1005
        %v1036 = vsel %vm1021, %v1003, %v1004
        %v1037 = vsel %vm1021, %v1018, %v1003
        %v1038 = vadd.f32 %v715, %v1036
        %v1039 = vadd.f32 %v719, %v1035
        %v1040 = vadd.f32 %v725, %v1034
        %v1041 = vadd.f32 %v729, %v1033
        %v1042 = vadd.f32 %v735, %v1032
        %v1043 = vadd.f32 %v739, %v1031
        %v1044 = vadd.f32 %v745, %v1030
        %v1045 = vadd.f32 %v749, %v1029
        %v1046 = vadd.f32 %v755, %v1028
        %v1047 = vadd.f32 %v759, %v1027
        %v1048 = vadd.f32 %v765, %v1026
        %v1049 = vadd.f32 %v769, %v1025
        %v1050 = vadd.f32 %v775, %v1024
        %v1051 = vadd.f32 %v779, %v1023
        %v1052 = vadd.f32 %v785, %v1022
        %v1053 = vadd.f32 %v789, %v1037
        %v1054 = vrot.slane %v828, 2
        %v1055 = vrot.slane %v832, 2
        %v1056 = vrot.slane %v838, 2
        %v1057 = vrot.slane %v842, 2
        %v1058 = vrot.slane %v848, 2
        %v1059 = vrot.slane %v852, 2
        %v1060 = vrot.slane %v858, 2
        %v1061 = vrot.slane %v862, 2
        %v1062 = vrot.slane %v868, 2
        %v1063 = vrot.slane %v872, 2
        %v1064 = vrot.slane %v878, 2
        %v1065 = vrot.slane %v882, 2
        %v1066 = vrot.slane %v888, 2
        %v1067 = vrot.slane %v892, 2
        %v1068 = vrot.slane %v898, 2
        %v1069 = vrot.slane %v902, 2
        %vm1070 = vcmp.lt.s32.totalorder %v1020, 6
        %v1071 = vsel %vm1070, %v1068, %v1069
        %v1072 = vsel %vm1070, %v1067, %v1068
        %v1073 = vsel %vm1070, %v1066, %v1067
        %v1074 = vsel %vm1070, %v1065, %v1066
        %v1075 = vsel %vm1070, %v1064, %v1065
        %v1076 = vsel %vm1070, %v1063, %v1064
        %v1077 = vsel %vm1070, %v1062, %v1063
        %v1078 = vsel %vm1070, %v1061, %v1062
        %v1079 = vsel %vm1070, %v1060, %v1061
        %v1080 = vsel %vm1070, %v1059, %v1060
        %v1081 = vsel %vm1070, %v1058, %v1059
        %v1082 = vsel %vm1070, %v1057, %v1058
        %v1083 = vsel %vm1070, %v1056, %v1057
        %v1084 = vsel %vm1070, %v1055, %v1056
        %v1085 = vsel %vm1070, %v1054, %v1055
        %v1086 = vsel %vm1070, %v1069, %v1054
        %v1087 = vadd.f32 %v1038, %v1085
        %v1088 = vadd.f32 %v1039, %v1084
        %v1089 = vadd.f32 %v1040, %v1083
        %v1090 = vadd.f32 %v1041, %v1082
        %v1091 = vadd.f32 %v1042, %v1081
        %v1092 = vadd.f32 %v1043, %v1080
        %v1093 = vadd.f32 %v1044, %v1079
        %v1094 = vadd.f32 %v1045, %v1078
        %v1095 = vadd.f32 %v1046, %v1077
        %v1096 = vadd.f32 %v1047, %v1076
        %v1097 = vadd.f32 %v1048, %v1075
        %v1098 = vadd.f32 %v1049, %v1074
        %v1099 = vadd.f32 %v1050, %v1073
        %v1100 = vadd.f32 %v1051, %v1072
        %v1101 = vadd.f32 %v1052, %v1071
        %v1102 = vadd.f32 %v1053, %v1086
        %v1103 = vrot.slane %v830, 3
        %v1104 = vrot.slane %v834, 3
        %v1105 = vrot.slane %v840, 3
        %v1106 = vrot.slane %v844, 3
        %v1107 = vrot.slane %v850, 3
        %v1108 = vrot.slane %v854, 3
        %v1109 = vrot.slane %v860, 3
        %v1110 = vrot.slane %v864, 3
        %v1111 = vrot.slane %v870, 3
        %v1112 = vrot.slane %v874, 3
        %v1113 = vrot.slane %v880, 3
        %v1114 = vrot.slane %v884, 3
        %v1115 = vrot.slane %v890, 3
        %v1116 = vrot.slane %v894, 3
        %v1117 = vrot.slane %v900, 3
        %v1118 = vrot.slane %v904, 3
        %vm1119 = vcmp.lt.s32.totalorder %v1020, 5
        %v1120 = vsel %vm1119, %v1117, %v1118
        %v1121 = vsel %vm1119, %v1116, %v1117
        %v1122 = vsel %vm1119, %v1115, %v1116
        %v1123 = vsel %vm1119, %v1114, %v1115
        %v1124 = vsel %vm1119, %v1113, %v1114
        %v1125 = vsel %vm1119, %v1112, %v1113
        %v1126 = vsel %vm1119, %v1111, %v1112
        %v1127 = vsel %vm1119, %v1110, %v1111
        %v1128 = vsel %vm1119, %v1109, %v1110
        %v1129 = vsel %vm1119, %v1108, %v1109
        %v1130 = vsel %vm1119, %v1107, %v1108
        %v1131 = vsel %vm1119, %v1106, %v1107
        %v1132 = vsel %vm1119, %v1105, %v1106
        %v1133 = vsel %vm1119, %v1104, %v1105
        %v1134 = vsel %vm1119, %v1103, %v1104
        %v1135 = vsel %vm1119, %v1118, %v1103
        %v1136 = vadd.f32 %v1087, %v1134
        %v1137 = vadd.f32 %v1088, %v1133
        %v1138 = vadd.f32 %v1089, %v1132
        %v1139 = vadd.f32 %v1090, %v1131
        %v1140 = vadd.f32 %v1091, %v1130
        %v1141 = vadd.f32 %v1092, %v1129
        %v1142 = vadd.f32 %v1093, %v1128
        %v1143 = vadd.f32 %v1094, %v1127
        %v1144 = vadd.f32 %v1095, %v1126
        %v1145 = vadd.f32 %v1096, %v1125
        %v1146 = vadd.f32 %v1097, %v1124
        %v1147 = vadd.f32 %v1098, %v1123
        %v1148 = vadd.f32 %v1099, %v1122
        %v1149 = vadd.f32 %v1100, %v1121
        %v1150 = vadd.f32 %v1101, %v1120
        %v1151 = vadd.f32 %v1102, %v1135
        %v1152 = vrot.slane %v941, 4
        %v1153 = vrot.slane %v944, 4
        %v1154 = vrot.slane %v949, 4
        %v1155 = vrot.slane %v952, 4
        %v1156 = vrot.slane %v957, 4
        %v1157 = vrot.slane %v960, 4
        %v1158 = vrot.slane %v965, 4
        %v1159 = vrot.slane %v968, 4
        %v1160 = vrot.slane %v973, 4
        %v1161 = vrot.slane %v976, 4
        %v1162 = vrot.slane %v981, 4
        %v1163 = vrot.slane %v984, 4
        %v1164 = vrot.slane %v989, 4
        %v1165 = vrot.slane %v992, 4
        %v1166 = vrot.slane %v997, 4
        %v1167 = vrot.slane %v1000, 4
        %vm1168 = vcmp.lt.s32.totalorder %v1020, 4
        %v1169 = vsel %vm1168, %v1166, %v1167
        %v1170 = vsel %vm1168, %v1165, %v1166
        %v1171 = vsel %vm1168, %v1164, %v1165
        %v1172 = vsel %vm1168, %v1163, %v1164
        %v1173 = vsel %vm1168, %v1162, %v1163
        %v1174 = vsel %vm1168, %v1161, %v1162
        %v1175 = vsel %vm1168, %v1160, %v1161
        %v1176 = vsel %vm1168, %v1159, %v1160
        %v1177 = vsel %vm1168, %v1158, %v1159
        %v1178 = vsel %vm1168, %v1157, %v1158
        %v1179 = vsel %vm1168, %v1156, %v1157
        %v1180 = vsel %vm1168, %v1155, %v1156
        %v1181 = vsel %vm1168, %v1154, %v1155
        %v1182 = vsel %vm1168, %v1153, %v1154
        %v1183 = vsel %vm1168, %v1152, %v1153
        %v1184 = vsel %vm1168, %v1167, %v1152
        %v1185 = vadd.f32 %v1136, %v1183
        %v1186 = vadd.f32 %v1137, %v1182
        %v1187 = vadd.f32 %v1138, %v1181
        %v1188 = vadd.f32 %v1139, %v1180
        %v1189 = vadd.f32 %v1140, %v1179
        %v1190 = vadd.f32 %v1141, %v1178
        %v1191 = vadd.f32 %v1142, %v1177
        %v1192 = vadd.f32 %v1143, %v1176
        %v1193 = vadd.f32 %v1144, %v1175
        %v1194 = vadd.f32 %v1145, %v1174
        %v1195 = vadd.f32 %v1146, %v1173
        %v1196 = vadd.f32 %v1147, %v1172
        %v1197 = vadd.f32 %v1148, %v1171
        %v1198 = vadd.f32 %v1149, %v1170
        %v1199 = vadd.f32 %v1150, %v1169
        %v1200 = vadd.f32 %v1151, %v1184
        %v1201 = vld [vmem:[%s3] sm:$0x1]
        %v1203 = vlaneseq
        %v1204 = vshrl.u32 %v1203, 7
        %v1205 = vsub.s32 0, %v1204
        %v1206 = vrot.slane %v1201, %v1205
        %v1208 = vadd.f32 %v1185, %v1206
        %v1209 = vadd.f32 %v1186, %v1206
        %v1210 = vadd.f32 %v1187, %v1206
        %v1211 = vadd.f32 %v1188, %v1206
        %v1212 = vadd.f32 %v1189, %v1206
        %v1213 = vadd.f32 %v1190, %v1206
        %v1214 = vadd.f32 %v1191, %v1206
        %v1215 = vadd.f32 %v1192, %v1206
        %v1216 = vadd.f32 %v1193, %v1206
        %v1217 = vadd.f32 %v1194, %v1206
        %v1218 = vadd.f32 %v1195, %v1206
        %v1219 = vadd.f32 %v1196, %v1206
        %v1220 = vadd.f32 %v1197, %v1206
        %v1221 = vadd.f32 %v1198, %v1206
        %v1222 = vadd.f32 %v1199, %v1206
        %v1223 = vadd.f32 %v1200, %v1206
        %v1224 = vmax.f32 %v1208, 0.0
        %v1225 = vmax.f32 %v1209, 0.0
        %v1226 = vmax.f32 %v1210, 0.0
        %v1227 = vmax.f32 %v1211, 0.0
        %v1228 = vmax.f32 %v1212, 0.0
        %v1229 = vmax.f32 %v1213, 0.0
        %v1230 = vmax.f32 %v1214, 0.0
        %v1231 = vmax.f32 %v1215, 0.0
        %v1232 = vmax.f32 %v1216, 0.0
        %v1233 = vmax.f32 %v1217, 0.0
        %v1234 = vmax.f32 %v1218, 0.0
        %v1235 = vmax.f32 %v1219, 0.0
        %v1236 = vmax.f32 %v1220, 0.0
        %v1237 = vmax.f32 %v1221, 0.0
        %v1238 = vmax.f32 %v1222, 0.0
        %v1239 = vmax.f32 %v1223, 0.0
        %v1240 = vadd.s32 %v1020, 8
        %v1241 = vld [vmem:[%s4] sm:$0x1]
        %v1242 = vlaneseq
        %v1243 = vshrl.u32 %v1242, 7
        %v1244 = vsub.s32 0, %v1243
        %v1245 = vrot.slane %v1241, %v1244
        %vm1246 = vcmp.le.s32.totalorder %v1020, %v1245
        %vm1247 = vcmp.le.s32.totalorder %v1240, %v1245
        %v1248 = vsel %vm1246, 1, 0
        %v1249 = vsel %vm1247, 1, 0
        %vm1250 = vcmp.eq.s32.totalorder %v1248, 1
        %vm1251 = vcmp.eq.s32.totalorder %v1249, 1
        %v1252 = vsel %vm1250, %v1224, 0.0
        %v1253 = vsel %vm1251, %v1225, 0.0
        %v1254 = vsel %vm1250, %v1226, 0.0
        %v1255 = vsel %vm1251, %v1227, 0.0
        %v1256 = vsel %vm1250, %v1228, 0.0
        %v1257 = vsel %vm1251, %v1229, 0.0
        %v1258 = vsel %vm1250, %v1230, 0.0
        %v1259 = vsel %vm1251, %v1231, 0.0
        %v1260 = vsel %vm1250, %v1232, 0.0
        %v1261 = vsel %vm1251, %v1233, 0.0
        %v1262 = vsel %vm1250, %v1234, 0.0
        %v1263 = vsel %vm1251, %v1235, 0.0
        %v1264 = vsel %vm1250, %v1236, 0.0
        %v1265 = vsel %vm1251, %v1237, 0.0
        %v1266 = vsel %vm1250, %v1238, 0.0
        %v1267 = vsel %vm1251, %v1239, 0.0
        %vm1268 = vcmask 195584
        %v1269 = vsel %vm1268, %v1252, -inf
        %v1270 = vsel %vm1268, %v1253, -inf
        %v1271 = vmax.f32 %v1269, %v1270
        %v1272 = vrot.slane %v1271, 4
        %v1273 = vmax.f32 %v1271, %v1272
        %v1274 = vrot.slane %v1273, 2
        %v1275 = vmax.f32 %v1273, %v1274
        %v1276 = vrot.slane %v1275, 1
        %v1277 = vmax.f32 %v1275, %v1276
        %v1278 = vsel %vm1268, %v1254, -inf
        %v1279 = vsel %vm1268, %v1255, -inf
        %v1280 = vmax.f32 %v1278, %v1279
        %v1281 = vrot.slane %v1280, 4
        %v1282 = vmax.f32 %v1280, %v1281
        %v1283 = vrot.slane %v1282, 2
        %v1284 = vmax.f32 %v1282, %v1283
        %v1285 = vrot.slane %v1284, 1
        %v1286 = vmax.f32 %v1284, %v1285
        %v1287 = vsel %vm1268, %v1256, -inf
        %v1288 = vsel %vm1268, %v1257, -inf
        %v1289 = vmax.f32 %v1287, %v1288
        %v1290 = vrot.slane %v1289, 4
        %v1291 = vmax.f32 %v1289, %v1290
        %v1292 = vrot.slane %v1291, 2
        %v1293 = vmax.f32 %v1291, %v1292
        %v1294 = vrot.slane %v1293, 1
        %v1295 = vmax.f32 %v1293, %v1294
        %v1296 = vsel %vm1268, %v1258, -inf
        %v1297 = vsel %vm1268, %v1259, -inf
        %v1298 = vmax.f32 %v1296, %v1297
        %v1299 = vrot.slane %v1298, 4
        %v1300 = vmax.f32 %v1298, %v1299
        %v1301 = vrot.slane %v1300, 2
        %v1302 = vmax.f32 %v1300, %v1301
        %v1303 = vrot.slane %v1302, 1
        %v1304 = vmax.f32 %v1302, %v1303
        %v1305 = vsel %vm1268, %v1260, -inf
        %v1306 = vsel %vm1268, %v1261, -inf
        %v1307 = vmax.f32 %v1305, %v1306
        %v1308 = vrot.slane %v1307, 4
        %v1309 = vmax.f32 %v1307, %v1308
        %v1310 = vrot.slane %v1309, 2
        %v1311 = vmax.f32 %v1309, %v1310
        %v1312 = vrot.slane %v1311, 1
        %v1313 = vmax.f32 %v1311, %v1312
        %v1314 = vsel %vm1268, %v1262, -inf
        %v1315 = vsel %vm1268, %v1263, -inf
        %v1316 = vmax.f32 %v1314, %v1315
        %v1317 = vrot.slane %v1316, 4
        %v1318 = vmax.f32 %v1316, %v1317
        %v1319 = vrot.slane %v1318, 2
        %v1320 = vmax.f32 %v1318, %v1319
        %v1321 = vrot.slane %v1320, 1
        %v1322 = vmax.f32 %v1320, %v1321
        %v1323 = vsel %vm1268, %v1264, -inf
        %v1324 = vsel %vm1268, %v1265, -inf
        %v1325 = vmax.f32 %v1323, %v1324
        %v1326 = vrot.slane %v1325, 4
        %v1327 = vmax.f32 %v1325, %v1326
        %v1328 = vrot.slane %v1327, 2
        %v1329 = vmax.f32 %v1327, %v1328
        %v1330 = vrot.slane %v1329, 1
        %v1331 = vmax.f32 %v1329, %v1330
        %v1332 = vsel %vm1268, %v1266, -inf
        %v1333 = vsel %vm1268, %v1267, -inf
        %v1334 = vmax.f32 %v1332, %v1333
        %v1335 = vrot.slane %v1334, 4
        %v1336 = vmax.f32 %v1334, %v1335
        %v1337 = vrot.slane %v1336, 2
        %v1338 = vmax.f32 %v1336, %v1337
        %v1339 = vrot.slane %v1338, 1
        %v1340 = vmax.f32 %v1338, %v1339
        %v1341 = vld [vmem:[%s5] sm:$0xff]
        %v1342 = vld [vmem:[%s5 + $0x8] sm:$0xff]
        %v1343 = vld [vmem:[%s5 + $0x10] sm:$0xff]
        %v1344 = vld [vmem:[%s6] sm:$0x1]
        %v1346 = vlaneseq
        %v1347 = vshrl.u32 %v1346, 7
        %v1348 = vsub.s32 0, %v1347
        %v1349 = vrot.slane %v1344, %v1348
        %vm1359 = vcmask 1041409
        %v1360 = vsel %vm1359, %v1286, %v1277
        %vm1361 = vcmask 1042434
        %v1362 = vsel %vm1361, %v1295, %v1360
        %vm1363 = vcmask 1043459
        %v1364 = vsel %vm1363, %v1304, %v1362
        %vm1365 = vcmask 1044484
        %v1366 = vsel %vm1365, %v1313, %v1364
        %vm1367 = vcmask 1045509
        %v1368 = vsel %vm1367, %v1322, %v1366
        %vm1369 = vcmask 1046534
        %v1370 = vsel %vm1369, %v1331, %v1368
        %vm1371 = vcmask 1047559
        %v1372 = vsel %vm1371, %v1340, %v1370
        %v1373 = vsel %vm1268, %v1372, 0
        %1375 = vmatprep.subr.mxu0 0.0
        %1376 = vmatpush1.msra.mxu0 %v1341
        %1377 = vmatprep.subr.mxu0 0.0
        %1378 = vmatpush1.msra.mxu0 %v1342
        %1379 = vmatprep.subr.mxu0 0.0
        %1380 = vmatpush1.msra.mxu0 %v1343
        %1381 = vmatprep.subr.mxu0 0.0
        %1382 = vmatpush1.msra.mxu0 0.0
        %1383 = vmatprep.subr.mxu0 0.0
        %1384 = vmatpush1.msra.mxu0 0.0
        %1385 = vmatprep.subr.mxu0 0.0
        %1386 = vmatpush1.msra.mxu0 0.0
        %1387 = vmatprep.subr.mxu0 0.0
        %1388 = vmatpush1.msra.mxu0 0.0
        %1389 = vmatprep.subr.mxu0 0.0
        %1390 = vmatpush1.msra.mxu0 0.0
        %1391 = vmatprep.subr.mxu0 0.0
        %1392 = vmatpush1.msra.mxu0 0.0
        %1393 = vmatprep.subr.mxu0 0.0
        %1394 = vmatpush1.msra.mxu0 0.0
        %1395 = vmatprep.subr.mxu0 0.0
        %1396 = vmatpush1.msra.mxu0 0.0
        %1397 = vmatprep.subr.mxu0 0.0
        %1398 = vmatpush1.msra.mxu0 0.0
        %1399 = vmatprep.subr.mxu0 0.0
        %1400 = vmatpush1.msra.mxu0 0.0
        %1401 = vmatprep.subr.mxu0 0.0
        %1402 = vmatpush1.msra.mxu0 0.0
        %1403 = vmatprep.subr.mxu0 0.0
        %1404 = vmatpush1.msra.mxu0 0.0
        %1405 = vmatprep.subr.mxu0 0.0
        %1406 = vmatpush1.msra.mxu0 0.0
        %1407 = vmatprep.subr.mxu0 0.0
        %1408 = vmatpush1.msra.mxu0 0.0
        %1409 = vmatprep.subr.mxu0 0.0
        %1410 = vmatpush1.msra.mxu0 0.0
        %1411 = vmatprep.subr.mxu0 0.0
        %1412 = vmatpush1.msra.mxu0 0.0
        %1413 = vmatprep.subr.mxu0 0.0
        %1414 = vmatpush1.msra.mxu0 0.0
        %1415 = vmatprep.subr.mxu0 0.0
        %1416 = vmatpush1.msra.mxu0 0.0
        %1417 = vmatprep.subr.mxu0 0.0
        %1418 = vmatpush1.msra.mxu0 0.0
        %1419 = vmatprep.subr.mxu0 0.0
        %1420 = vmatpush1.msra.mxu0 0.0
        %1421 = vmatprep.subr.mxu0 0.0
        %1422 = vmatpush1.msra.mxu0 0.0
        %1423 = vmatprep.subr.mxu0 0.0
        %1424 = vmatpush1.msra.mxu0 0.0
        %1425 = vmatprep.subr.mxu0 0.0
        %1426 = vmatpush1.msra.mxu0 0.0
        %1427 = vmatprep.subr.mxu0 0.0
        %1428 = vmatpush1.msra.mxu0 0.0
        %1429 = vmatprep.subr.mxu0 0.0
        %1430 = vmatpush1.msra.mxu0 0.0
        %1431 = vmatprep.subr.mxu0 0.0
        %1432 = vmatpush1.msra.mxu0 0.0
        %1433 = vmatprep.subr.mxu0 0.0
        %1434 = vmatpush1.msra.mxu0 0.0
        %1435 = vmatprep.subr.mxu0 0.0
        %1436 = vmatpush1.msra.mxu0 0.0
        %1437 = vmatprep.subr.mxu0 0.0
        %1438 = vmatpush1.msra.mxu0 0.0
        %1439 = vmatprep.mubr.f32.mxu0 0.0
        %1440 = vmatmul.mubr.f32.gmra.mrb[0].mxu0 %v1373
        %v1441 = vpop.f32.mrb[0].mxu0
        %v1442 = vadd.f32 %v1349, %v1441
        %v1443 = vpop.f32.mrb[0].mxu0
        %1444 = vdwg.mxu0
        %1445 = vst [vmem:[%s284] sm:$0xff] %v1442
        %s1446 = sand.u32 %s182, 1
        %s1447 = scalar_lea.sflag [#allocation4], %s1446
        %s1448 = sand.u32 %s182, 1
        %s1449 = smul.addr %s1448, 8
        %s1450 = scalar_lea.vmem [#allocation5], %s1449
        // Predicated region
        $region53: #{tpu_custom_call.1} parent=47 // pred_check
          %p1451 = pneg %p192
        $region54: #{tpu_custom_call.1} parent=47 // pred_check_branch
          %1453 = sbr.rel (%p1451) target = $region56
        $region55: #{tpu_custom_call.1} parent=47 // pred_region
          %s1455 = ssub.s32 128, 128
          %1456 = vsyncadd %s1447, %s1455
          %s1457 = smul.addr %s22, 128
          %s1458 = scalar_lea.hbm %s7, %s1457
          %s1460 = sshll.u32 %s1450, 4
          %s1461 = int_to_ptr.vmem [resolvable:$true] %s1460
          %1463 = dma.vmem_to_hbm [thread:$0]  %s1461, 128, %s1458, %s1447
        $region56: #{tpu_custom_call.1} parent=47 // pred_fallthru
          _
      $region48: #{tpu_custom_call.1} parent=5 // pred_fallthru
        _
      %p1464 = scmp.le.s32.totalorder 2, %s17
      // Predicated region
      $region57: #{tpu_custom_call.1} parent=5 // pred_check
        %p1465 = pneg %p1464
      $region58: #{tpu_custom_call.1} parent=5 // pred_check_branch
        %1467 = sbr.rel (%p1465) target = $region60
      $region59: #{tpu_custom_call.1} parent=5 // pred_region
        %s1468 = ssub.s32 %s17, 2
        // Predicated region
        $region61: #{tpu_custom_call.1} parent=59 // pred_check
          %p1469 = pneg %p198
        $region62: #{tpu_custom_call.1} parent=59 // pred_check_branch
          %1471 = sbr.rel (%p1469) target = $region64
        $region63: #{tpu_custom_call.1} parent=59 // pred_region
          %s1472 = sand.u32 %s183, 1
          %s1473 = scalar_lea.sflag [#allocation4], %s1472
          %s1474 = sand.u32 %s183, 1
          %s1475 = smul.addr %s1474, 8
          %s1476 = scalar_lea.vmem [#allocation5], %s1475
          %1477 = dma.done %s1473, 128
        $region64: #{tpu_custom_call.1} parent=59 // pred_fallthru
          _
      $region60: #{tpu_custom_call.1} parent=5 // pred_fallthru
        _
    $region6: #{tpu_custom_call.1} parent=1 // loop_footer
      %s21 = sadd.s32 1, %s17
    $region7: #{tpu_custom_call.1} parent=1 // loop_footer_branch
      %16 = sbr.rel target = $region3
    $region8: #{tpu_custom_call.1} parent=1 // loop_exit
      _
    %1478 = vsyncpa [#allocation3], 1
    %s1479 = scalar_lea.sflag [#allocation3], 1
    %1480 = vsyncpa %s1479, 1
    %1481 = vsyncpa [#allocation4], 1
    %s1482 = scalar_lea.sflag [#allocation4], 1
    %1483 = vsyncpa %s1482, 1

</llo_original>
